<compile_context>
chip_gen: v7x
topology: tpu7x:2x2x1
jax: 0.10.0
libtpu: 0.0.40
codegen_flags: <defaults>
</compile_context>

<pallas_src>
import jax
import jax.numpy as jnp
from jax.experimental import pallas as pl
from jax.experimental.pallas import tpu as pltpu

C = 14  # atoms per residue


def atom_interaction_mask_batch(pos14, ppi_code, cutoff=4.0):
    # TODO(synk): atom_interaction_mask_batch was not defined in the provided
    # source; this reproduces the usual "atoms of residues on different PPI
    # sides within a distance cutoff" definition (plain-JAX glue, not kernel).
    n, l, c, _ = pos14.shape
    pos = pos14.reshape(n, l * c, 3)
    d2 = jnp.sum((pos[:, :, None, :] - pos[:, None, :, :]) ** 2, axis=-1)
    code = jnp.repeat(ppi_code, c, axis=1)                        # (N, L*14)
    diff_chain = code[:, :, None] != code[:, None, :]
    return jnp.logical_and(d2 < cutoff * cutoff, diff_chain)      # (N, M, M) bool


# ---------------------------------------------------------------------------
# Pallas kernel: one grid step = (batch n, residue row-block l1).
# ---------------------------------------------------------------------------
def pipool_kernel(fwt_rows_ref, fmut_rows_ref, fwt_full_ref, fmut_full_ref,
                  mwt_ref, mmut_ref, wa2_ref, wb2_ref, s_ref, scal_ref,
                  out_ref, sb_wt_ref, sb_mut_ref, acc_ref):
    l1 = pl.program_id(1)

    @pl.when(l1 == 0)
    def _():
        # Once per batch element: beta_j = f_j @ (Wb @ w2), folded into the
        # selection matrix so the beta term is just one extra MXU matmul.
        beta_wt = jnp.dot(fwt_full_ref[...], wb2_ref[...],
                          preferred_element_type=jnp.float32)          # (M, 1)
        beta_mut = jnp.dot(fmut_full_ref[...], wb2_ref[...],
                           preferred_element_type=jnp.float32)
        sb_wt_ref[...] = s_ref[...] * beta_wt                           # (M, 14)
        sb_mut_ref[...] = s_ref[...] * beta_mut
        acc_ref[...] = jnp.zeros_like(acc_ref)

    b1w2 = scal_ref[0]
    s = s_ref[...]                                                      # (M, 14)
    m_wt = mwt_ref[...].astype(jnp.float32)                             # (14, M)
    m_mut = mmut_ref[...].astype(jnp.float32)

    # alpha_i = f_i @ (Wa @ w2) + b1 @ w2 for the 14 atoms of residue l1.
    a_wt = jnp.dot(fwt_rows_ref[...], wa2_ref[...],
                   preferred_element_type=jnp.float32) + b1w2           # (14, 1)
    a_mut = jnp.dot(fmut_rows_ref[...], wa2_ref[...],
                    preferred_element_type=jnp.float32) + b1w2

    # For this l1 block:
    #   contrib[c1, c2] = sum_{l2} mask[c1, l2*14+c2] * (alpha[c1] + beta[l2*14+c2])
    #                   = alpha * (mask @ S) + mask @ (S * beta)
    c_wt = (a_wt * jnp.dot(m_wt, s, preferred_element_type=jnp.float32)
            + jnp.dot(m_wt, sb_wt_ref[...], preferred_element_type=jnp.float32))
    c_mut = (a_mut * jnp.dot(m_mut, s, preferred_element_type=jnp.float32)
             + jnp.dot(m_mut, sb_mut_ref[...], preferred_element_type=jnp.float32))

    acc_ref[...] += c_mut - c_wt                                        # (14, 14)

    @pl.when(l1 == pl.num_programs(1) - 1)
    def _():
        out_ref[...] = (acc_ref[...] + scal_ref[1])[None, :, :].astype(out_ref.dtype)


def _pipool_pallas(feats_wt, feats_mut, mask_wt, mask_mut, w1, b1, w2, b2):
    n, m, d = feats_wt.shape
    l = m // C

    # Fold fc_2 into fc_1 (exact: both are linear, applied back to back).
    w2v = jnp.reshape(w2, (-1,)).astype(jnp.float32)                    # (H,)
    wa2 = (jnp.transpose(w1[:, :d]) @ w2v).reshape(d, 1).astype(jnp.float32)
    wb2 = (jnp.transpose(w1[:, d:]) @ w2v).reshape(d, 1).astype(jnp.float32)
    scalars = jnp.stack([jnp.dot(b1, w2v),
                         jnp.reshape(b2, ())]).astype(jnp.float32)      # (2,) -> SMEM

    # Tiled-identity selection matrix: S[l*14 + c, c'] = (c == c').
    s_mat = jnp.tile(jnp.eye(C, dtype=jnp.float32), (l, 1))             # (M, 14)

    f_wt = feats_wt.astype(jnp.float32)
    f_mut = feats_mut.astype(jnp.float32)
    f_wt4 = f_wt.reshape(n, l, C, d)
    f_mut4 = f_mut.reshape(n, l, C, d)
    # Keep masks 1-byte in HBM; pure reshape (no transpose, no extra HBM copy).
    m_wt8 = mask_wt.astype(jnp.int8).reshape(n, l, C, m)
    m_mut8 = mask_mut.astype(jnp.int8).reshape(n, l, C, m)

    out = pl.pallas_call(
        pipool_kernel,
        out_shape=jax.ShapeDtypeStruct((n, C, C), jnp.float32),
        grid=(n, l),
        in_specs=[
            pl.BlockSpec((None, None, C, d), lambda i, j: (i, j, 0, 0)),  # wt rows of l1
            pl.BlockSpec((None, None, C, d), lambda i, j: (i, j, 0, 0)),  # mut rows of l1
            pl.BlockSpec((None, m, d), lambda i, j: (i, 0, 0)),           # wt full (beta)
            pl.BlockSpec((None, m, d), lambda i, j: (i, 0, 0)),           # mut full (beta)
            pl.BlockSpec((None, None, C, m), lambda i, j: (i, j, 0, 0)),  # wt mask slab
            pl.BlockSpec((None, None, C, m), lambda i, j: (i, j, 0, 0)),  # mut mask slab
            pl.BlockSpec((d, 1), lambda i, j: (0, 0)),                    # Wa @ w2
            pl.BlockSpec((d, 1), lambda i, j: (0, 0)),                    # Wb @ w2
            pl.BlockSpec((m, C), lambda i, j: (0, 0)),                    # S
            pl.BlockSpec(memory_space=pltpu.MemorySpace.SMEM),            # [b1@w2, b2]
        ],
        out_specs=pl.BlockSpec((1, C, C), lambda i, j: (i, 0, 0)),
        scratch_shapes=[
            pltpu.VMEM((m, C), jnp.float32),    # S * beta_wt   (per batch)
            pltpu.VMEM((m, C), jnp.float32),    # S * beta_mut  (per batch)
            pltpu.VMEM((C, C), jnp.float32),    # accumulator over l1
        ],
        compiler_params=pltpu.CompilerParams(
            dimension_semantics=("parallel", "arbitrary")),
    )(f_wt4, f_mut4, f_wt, f_mut, m_wt8, m_mut8, wa2, wb2, s_mat, scalars)

    return out.reshape(n, C * C)


def pipool_forward(feats_wt, feats_mut, pos14_wt, pos14_mut,
                   ppi_code_wt, ppi_code_mut, w1, b1, w2, b2):
    mask_wt = atom_interaction_mask_batch(pos14_wt, ppi_code_wt)
    mask_mut = atom_interaction_mask_batch(pos14_mut, ppi_code_mut)
    return _pipool_pallas(feats_wt, feats_mut, mask_wt, mask_mut, w1, b1, w2, b2)


# ---------------------------------------------------------------------------
# Pure-JAX reference mirroring the PyTorch forward exactly (no folding).
# ---------------------------------------------------------------------------
def reference(feats_wt, feats_mut, pos14_wt, pos14_mut, ppi_code_wt, ppi_code_mut,
              w1, b1, w2, b2):
    mask_wt = atom_interaction_mask_batch(pos14_wt, ppi_code_wt)
    mask_mut = atom_interaction_mask_batch(pos14_mut, ppi_code_mut)
    d = feats_wt.shape[-1]
    wa = jnp.transpose(w1[:, :d])          # (D, H)
    wb = jnp.transpose(w1[:, d:])
    w2v = jnp.reshape(w2, (-1,))

    def edge(feats, mask):
        a = feats @ wa + b1                              # (N, M, H)
        b = feats @ wb
        e = a[:, :, None, :] + b[:, None, :, :]          # (N, M, M, H)
        return jnp.where(mask[..., None], e, 0.0)

    diff = edge(feats_mut, mask_mut) - edge(feats_wt, mask_wt)
    n, m, _, h = diff.shape
    l = m // C
    cnt = diff.reshape(n, l, C, l, C, h).sum(axis=(1, 3))   # (N, 14, 14, H)
    out = cnt @ w2v + jnp.reshape(b2, ())                    # (N, 14, 14)
    return out.reshape(n, -1)


if __name__ == "__main__":
    N, L, D, H = 2, 4, 8, 16
    M = L * C

    key = jax.random.PRNGKey(0)
    keys = jax.random.split(key, 10)

    # fc_1: Linear(2D -> H); fc_2: Linear(H -> 1) — torch parameter layouts.
    w1 = jax.random.normal(keys[0], (H, 2 * D), jnp.float32) * 0.1
    b1 = jax.random.normal(keys[1], (H,), jnp.float32) * 0.1
    w2 = jax.random.normal(keys[2], (1, H), jnp.float32) * 0.1
    b2 = jax.random.normal(keys[3], (1,), jnp.float32) * 0.1

    feats_wt = jax.random.normal(keys[4], (N, M, D), jnp.float32)
    feats_mut = jax.random.normal(keys[5], (N, M, D), jnp.float32)
    pos14_wt = jax.random.normal(keys[6], (N, L, C, 3), jnp.float32) * 3.0
    pos14_mut = jax.random.normal(keys[7], (N, L, C, 3), jnp.float32) * 3.0
    ppi_code_wt = jax.random.randint(keys[8], (N, L), 0, 2)
    ppi_code_mut = jax.random.randint(keys[9], (N, L), 0, 2)

    run = jax.jit(pipool_forward)
    out = run(feats_wt, feats_mut, pos14_wt, pos14_mut, ppi_code_wt, ppi_code_mut,
              w1, b1, w2, b2)
    out = jax.block_until_ready(out)

    ref = reference(feats_wt, feats_mut, pos14_wt, pos14_mut, ppi_code_wt,
                    ppi_code_mut, w1, b1, w2, b2)
    assert out.shape == (N, C * C), out.shape
    err = float(jnp.max(jnp.abs(out - ref)))
    assert jnp.allclose(out, ref, atol=1e-4, rtol=1e-4), err

    print("KERNEL_OK")
</pallas_src>

<mosaic_0001>
module attributes {stable_mosaic.version = 11 : i64} {
  func.func @pipool_kernel(%arg0: i32, %arg1: i32, %arg2: memref<1x1x14x8xf32, #tpu.memory_space<vmem>>, %arg3: memref<1x1x14x8xf32, #tpu.memory_space<vmem>>, %arg4: memref<1x56x8xf32, #tpu.memory_space<vmem>>, %arg5: memref<1x56x8xf32, #tpu.memory_space<vmem>>, %arg6: memref<1x1x14x56xi8, #tpu.memory_space<vmem>>, %arg7: memref<1x1x14x56xi8, #tpu.memory_space<vmem>>, %arg8: memref<8x1xf32, #tpu.memory_space<vmem>>, %arg9: memref<8x1xf32, #tpu.memory_space<vmem>>, %arg10: memref<56x14xf32, #tpu.memory_space<vmem>>, %arg11: memref<2xf32, #tpu.memory_space<smem>>, %arg12: memref<1x14x14xf32, #tpu.memory_space<vmem>>, %arg13: memref<56x14xf32, #tpu.memory_space<vmem>>, %arg14: memref<56x14xf32, #tpu.memory_space<vmem>>, %arg15: memref<14x14xf32, #tpu.memory_space<vmem>>) attributes {dimension_semantics = [#tpu.dimension_semantics<parallel>, #tpu.dimension_semantics<arbitrary>], iteration_bounds = array<i64: 2, 4>, scalar_prefetch = 0 : i64, scratch_operands = 3 : i64, tpu.core_type = #tpu.core_type<tc>, window_params = [{transform_indices = @transform_0, window_bounds = array<i64: 1, 1, 14, 8>}, {transform_indices = @transform_1, window_bounds = array<i64: 1, 1, 14, 8>}, {transform_indices = @transform_2, window_bounds = array<i64: 1, 56, 8>}, {transform_indices = @transform_3, window_bounds = array<i64: 1, 56, 8>}, {transform_indices = @transform_4, window_bounds = array<i64: 1, 1, 14, 56>}, {transform_indices = @transform_5, window_bounds = array<i64: 1, 1, 14, 56>}, {pipeline_mode = #tpu.pipeline_mode<synchronous>, transform_indices = @transform_6, window_bounds = array<i64: 8, 1>}, {pipeline_mode = #tpu.pipeline_mode<synchronous>, transform_indices = @transform_7, window_bounds = array<i64: 8, 1>}, {pipeline_mode = #tpu.pipeline_mode<synchronous>, transform_indices = @transform_8, window_bounds = array<i64: 56, 14>}, {transform_indices = @transform_9, window_bounds = array<i64: 2>}, {transform_indices = @transform_10, window_bounds = array<i64: 1, 14, 14>}]} {
    %c0_i32 = arith.constant 0 : i32
    %0 = arith.cmpi eq, %arg1, %c0_i32 : i32
    %1 = arith.extui %0 : i1 to i32
    %c0_i32_0 = arith.constant 0 : i32
    %2 = arith.cmpi ne, %1, %c0_i32_0 : i32
    scf.if %2 {
      %c0_37 = arith.constant 0 : index
      %c0_38 = arith.constant 0 : index
      %c0_39 = arith.constant 0 : index
      %42 = vector.load %arg4[%c0_37, %c0_38, %c0_39] : memref<1x56x8xf32, #tpu.memory_space<vmem>>, vector<1x56x8xf32>
      %43 = vector.shape_cast %42 : vector<1x56x8xf32> to vector<56x8xf32>
      %c0_40 = arith.constant 0 : index
      %c0_41 = arith.constant 0 : index
      %44 = vector.load %arg9[%c0_40, %c0_41] : memref<8x1xf32, #tpu.memory_space<vmem>>, vector<8x1xf32>
      %cst_42 = arith.constant dense<0.000000e+00> : vector<56x1xf32>
      %45 = tpu.matmul %43, %44, %cst_42 {dimension_numbers = #tpu.dot_dimension_numbers<[1], [0], [0], [1], [0, 0, 1, 1], [], []>} : vector<56x8xf32>, vector<8x1xf32>, vector<56x1xf32> -> vector<56x1xf32>
      %c0_43 = arith.constant 0 : index
      %c0_44 = arith.constant 0 : index
      %c0_45 = arith.constant 0 : index
      %46 = vector.load %arg5[%c0_43, %c0_44, %c0_45] : memref<1x56x8xf32, #tpu.memory_space<vmem>>, vector<1x56x8xf32>
      %47 = vector.shape_cast %46 : vector<1x56x8xf32> to vector<56x8xf32>
      %c0_46 = arith.constant 0 : index
      %c0_47 = arith.constant 0 : index
      %48 = vector.load %arg9[%c0_46, %c0_47] : memref<8x1xf32, #tpu.memory_space<vmem>>, vector<8x1xf32>
      %cst_48 = arith.constant dense<0.000000e+00> : vector<56x1xf32>
      %49 = tpu.matmul %47, %48, %cst_48 {dimension_numbers = #tpu.dot_dimension_numbers<[1], [0], [0], [1], [0, 0, 1, 1], [], []>} : vector<56x8xf32>, vector<8x1xf32>, vector<56x1xf32> -> vector<56x1xf32>
      %c0_49 = arith.constant 0 : index
      %c0_50 = arith.constant 0 : index
      %50 = vector.load %arg10[%c0_49, %c0_50] : memref<56x14xf32, #tpu.memory_space<vmem>>, vector<56x14xf32>
      %51 = vector.broadcast %45 : vector<56x1xf32> to vector<56x14xf32>
      %52 = arith.mulf %50, %51 : vector<56x14xf32>
      %c0_51 = arith.constant 0 : index
      %c0_52 = arith.constant 0 : index
      %53 = vector.load %arg13[%c0_51, %c0_52] : memref<56x14xf32, #tpu.memory_space<vmem>>, vector<56x14xf32>
      tpu.vector_store %arg13[%c0_51, %c0_52], %52 {strides = array<i32>} : memref<56x14xf32, #tpu.memory_space<vmem>>, vector<56x14xf32>,
      %c0_53 = arith.constant 0 : index
      %c0_54 = arith.constant 0 : index
      %54 = vector.load %arg10[%c0_53, %c0_54] : memref<56x14xf32, #tpu.memory_space<vmem>>, vector<56x14xf32>
      %55 = vector.broadcast %49 : vector<56x1xf32> to vector<56x14xf32>
      %56 = arith.mulf %54, %55 : vector<56x14xf32>
      %c0_55 = arith.constant 0 : index
      %c0_56 = arith.constant 0 : index
      %57 = vector.load %arg14[%c0_55, %c0_56] : memref<56x14xf32, #tpu.memory_space<vmem>>, vector<56x14xf32>
      tpu.vector_store %arg14[%c0_55, %c0_56], %56 {strides = array<i32>} : memref<56x14xf32, #tpu.memory_space<vmem>>, vector<56x14xf32>,
      %cst_57 = arith.constant 0.000000e+00 : f32
      %58 = vector.broadcast %cst_57 : f32 to vector<14x14xf32>
      %c0_58 = arith.constant 0 : index
      %c0_59 = arith.constant 0 : index
      %59 = vector.load %arg15[%c0_58, %c0_59] : memref<14x14xf32, #tpu.memory_space<vmem>>, vector<14x14xf32>
      tpu.vector_store %arg15[%c0_58, %c0_59], %58 {strides = array<i32>} : memref<14x14xf32, #tpu.memory_space<vmem>>, vector<14x14xf32>,
    } else {
    }
    %c0 = arith.constant 0 : index
    %3 = memref.load %arg11[%c0] : memref<2xf32, #tpu.memory_space<smem>>
    %c0_1 = arith.constant 0 : index
    %c0_2 = arith.constant 0 : index
    %4 = vector.load %arg10[%c0_1, %c0_2] : memref<56x14xf32, #tpu.memory_space<vmem>>, vector<56x14xf32>
    %c0_3 = arith.constant 0 : index
    %c0_4 = arith.constant 0 : index
    %c0_5 = arith.constant 0 : index
    %c0_6 = arith.constant 0 : index
    %5 = vector.load %arg6[%c0_3, %c0_4, %c0_5, %c0_6] : memref<1x1x14x56xi8, #tpu.memory_space<vmem>>, vector<1x1x14x56xi8>
    %6 = vector.shape_cast %5 : vector<1x1x14x56xi8> to vector<14x56xi8>
    %7 = arith.sitofp %6 : vector<14x56xi8> to vector<14x56xf32>
    %c0_7 = arith.constant 0 : index
    %c0_8 = arith.constant 0 : index
    %c0_9 = arith.constant 0 : index
    %c0_10 = arith.constant 0 : index
    %8 = vector.load %arg7[%c0_7, %c0_8, %c0_9, %c0_10] : memref<1x1x14x56xi8, #tpu.memory_space<vmem>>, vector<1x1x14x56xi8>
    %9 = vector.shape_cast %8 : vector<1x1x14x56xi8> to vector<14x56xi8>
    %10 = arith.sitofp %9 : vector<14x56xi8> to vector<14x56xf32>
    %c0_11 = arith.constant 0 : index
    %c0_12 = arith.constant 0 : index
    %c0_13 = arith.constant 0 : index
    %c0_14 = arith.constant 0 : index
    %11 = vector.load %arg2[%c0_11, %c0_12, %c0_13, %c0_14] : memref<1x1x14x8xf32, #tpu.memory_space<vmem>>, vector<1x1x14x8xf32>
    %12 = vector.shape_cast %11 : vector<1x1x14x8xf32> to vector<14x8xf32>
    %c0_15 = arith.constant 0 : index
    %c0_16 = arith.constant 0 : index
    %13 = vector.load %arg8[%c0_15, %c0_16] : memref<8x1xf32, #tpu.memory_space<vmem>>, vector<8x1xf32>
    %cst = arith.constant dense<0.000000e+00> : vector<14x1xf32>
    %14 = tpu.matmul %12, %13, %cst {dimension_numbers = #tpu.dot_dimension_numbers<[1], [0], [0], [1], [0, 0, 1, 1], [], []>} : vector<14x8xf32>, vector<8x1xf32>, vector<14x1xf32> -> vector<14x1xf32>
    %15 = vector.broadcast %3 : f32 to vector<14x1xf32>
    %16 = arith.addf %14, %15 : vector<14x1xf32>
    %c0_17 = arith.constant 0 : index
    %c0_18 = arith.constant 0 : index
    %c0_19 = arith.constant 0 : index
    %c0_20 = arith.constant 0 : index
    %17 = vector.load %arg3[%c0_17, %c0_18, %c0_19, %c0_20] : memref<1x1x14x8xf32, #tpu.memory_space<vmem>>, vector<1x1x14x8xf32>
    %18 = vector.shape_cast %17 : vector<1x1x14x8xf32> to vector<14x8xf32>
    %c0_21 = arith.constant 0 : index
    %c0_22 = arith.constant 0 : index
    %19 = vector.load %arg8[%c0_21, %c0_22] : memref<8x1xf32, #tpu.memory_space<vmem>>, vector<8x1xf32>
    %cst_23 = arith.constant dense<0.000000e+00> : vector<14x1xf32>
    %20 = tpu.matmul %18, %19, %cst_23 {dimension_numbers = #tpu.dot_dimension_numbers<[1], [0], [0], [1], [0, 0, 1, 1], [], []>} : vector<14x8xf32>, vector<8x1xf32>, vector<14x1xf32> -> vector<14x1xf32>
    %21 = vector.broadcast %3 : f32 to vector<14x1xf32>
    %22 = arith.addf %20, %21 : vector<14x1xf32>
    %cst_24 = arith.constant dense<0.000000e+00> : vector<14x14xf32>
    %23 = tpu.matmul %7, %4, %cst_24 {dimension_numbers = #tpu.dot_dimension_numbers<[1], [0], [0], [1], [0, 0, 1, 1], [], []>} : vector<14x56xf32>, vector<56x14xf32>, vector<14x14xf32> -> vector<14x14xf32>
    %24 = vector.broadcast %16 : vector<14x1xf32> to vector<14x14xf32>
    %25 = arith.mulf %24, %23 : vector<14x14xf32>
    %c0_25 = arith.constant 0 : index
    %c0_26 = arith.constant 0 : index
    %26 = vector.load %arg13[%c0_25, %c0_26] : memref<56x14xf32, #tpu.memory_space<vmem>>, vector<56x14xf32>
    %cst_27 = arith.constant dense<0.000000e+00> : vector<14x14xf32>
    %27 = tpu.matmul %7, %26, %cst_27 {dimension_numbers = #tpu.dot_dimension_numbers<[1], [0], [0], [1], [0, 0, 1, 1], [], []>} : vector<14x56xf32>, vector<56x14xf32>, vector<14x14xf32> -> vector<14x14xf32>
    %28 = arith.addf %25, %27 : vector<14x14xf32>
    %cst_28 = arith.constant dense<0.000000e+00> : vector<14x14xf32>
    %29 = tpu.matmul %10, %4, %cst_28 {dimension_numbers = #tpu.dot_dimension_numbers<[1], [0], [0], [1], [0, 0, 1, 1], [], []>} : vector<14x56xf32>, vector<56x14xf32>, vector<14x14xf32> -> vector<14x14xf32>
    %30 = vector.broadcast %22 : vector<14x1xf32> to vector<14x14xf32>
    %31 = arith.mulf %30, %29 : vector<14x14xf32>
    %c0_29 = arith.constant 0 : index
    %c0_30 = arith.constant 0 : index
    %32 = vector.load %arg14[%c0_29, %c0_30] : memref<56x14xf32, #tpu.memory_space<vmem>>, vector<56x14xf32>
    %cst_31 = arith.constant dense<0.000000e+00> : vector<14x14xf32>
    %33 = tpu.matmul %10, %32, %cst_31 {dimension_numbers = #tpu.dot_dimension_numbers<[1], [0], [0], [1], [0, 0, 1, 1], [], []>} : vector<14x56xf32>, vector<56x14xf32>, vector<14x14xf32> -> vector<14x14xf32>
    %34 = arith.addf %31, %33 : vector<14x14xf32>
    %c0_32 = arith.constant 0 : index
    %c0_33 = arith.constant 0 : index
    %35 = vector.load %arg15[%c0_32, %c0_33] : memref<14x14xf32, #tpu.memory_space<vmem>>, vector<14x14xf32>
    %36 = arith.subf %34, %28 : vector<14x14xf32>
    %37 = arith.addf %35, %36 : vector<14x14xf32>
    %c0_34 = arith.constant 0 : index
    %c0_35 = arith.constant 0 : index
    %38 = vector.load %arg15[%c0_34, %c0_35] : memref<14x14xf32, #tpu.memory_space<vmem>>, vector<14x14xf32>
    tpu.vector_store %arg15[%c0_34, %c0_35], %37 {strides = array<i32>} : memref<14x14xf32, #tpu.memory_space<vmem>>, vector<14x14xf32>,
    %c3_i32 = arith.constant 3 : i32
    %39 = arith.cmpi eq, %arg1, %c3_i32 : i32
    %40 = arith.extui %39 : i1 to i32
    %c0_i32_36 = arith.constant 0 : i32
    %41 = arith.cmpi ne, %40, %c0_i32_36 : i32
    scf.if %41 {
      %c0_37 = arith.constant 0 : index
      %c0_38 = arith.constant 0 : index
      %42 = vector.load %arg15[%c0_37, %c0_38] : memref<14x14xf32, #tpu.memory_space<vmem>>, vector<14x14xf32>
      %c1 = arith.constant 1 : index
      %43 = memref.load %arg11[%c1] : memref<2xf32, #tpu.memory_space<smem>>
      %44 = vector.broadcast %43 : f32 to vector<14x14xf32>
      %45 = arith.addf %42, %44 : vector<14x14xf32>
      %46 = vector.shape_cast %45 : vector<14x14xf32> to vector<1x14x14xf32>
      %c0_39 = arith.constant 0 : index
      %c0_40 = arith.constant 0 : index
      %c0_41 = arith.constant 0 : index
      %47 = vector.load %arg12[%c0_39, %c0_40, %c0_41] : memref<1x14x14xf32, #tpu.memory_space<vmem>>, vector<1x14x14xf32>
      tpu.vector_store %arg12[%c0_39, %c0_40, %c0_41], %46 {strides = array<i32>} : memref<1x14x14xf32, #tpu.memory_space<vmem>>, vector<1x14x14xf32>,
    } else {
    }
    return
  }
  func.func @transform_0(%arg0: i32, %arg1: i32) -> (i32, i32, i32, i32) {
    %c0_i32 = arith.constant 0 : i32
    %c0_i32_0 = arith.constant 0 : i32
    %c0_i32_1 = arith.constant 0 : i32
    return %arg0, %arg1, %c0_i32, %c0_i32_0 : i32, i32, i32, i32
  }
  func.func @transform_1(%arg0: i32, %arg1: i32) -> (i32, i32, i32, i32) {
    %c0_i32 = arith.constant 0 : i32
    %c0_i32_0 = arith.constant 0 : i32
    %c0_i32_1 = arith.constant 0 : i32
    return %arg0, %arg1, %c0_i32, %c0_i32_0 : i32, i32, i32, i32
  }
  func.func @transform_2(%arg0: i32, %arg1: i32) -> (i32, i32, i32) {
    %c0_i32 = arith.constant 0 : i32
    %c0_i32_0 = arith.constant 0 : i32
    %c0_i32_1 = arith.constant 0 : i32
    return %arg0, %c0_i32, %c0_i32_0 : i32, i32, i32
  }
  func.func @transform_3(%arg0: i32, %arg1: i32) -> (i32, i32, i32) {
    %c0_i32 = arith.constant 0 : i32
    %c0_i32_0 = arith.constant 0 : i32
    %c0_i32_1 = arith.constant 0 : i32
    return %arg0, %c0_i32, %c0_i32_0 : i32, i32, i32
  }
  func.func @transform_4(%arg0: i32, %arg1: i32) -> (i32, i32, i32, i32) {
    %c0_i32 = arith.constant 0 : i32
    %c0_i32_0 = arith.constant 0 : i32
    %c0_i32_1 = arith.constant 0 : i32
    return %arg0, %arg1, %c0_i32, %c0_i32_0 : i32, i32, i32, i32
  }
  func.func @transform_5(%arg0: i32, %arg1: i32) -> (i32, i32, i32, i32) {
    %c0_i32 = arith.constant 0 : i32
    %c0_i32_0 = arith.constant 0 : i32
    %c0_i32_1 = arith.constant 0 : i32
    return %arg0, %arg1, %c0_i32, %c0_i32_0 : i32, i32, i32, i32
  }
  func.func @transform_6(%arg0: i32, %arg1: i32) -> (i32, i32) {
    %c0_i32 = arith.constant 0 : i32
    %c0_i32_0 = arith.constant 0 : i32
    %c0_i32_1 = arith.constant 0 : i32
    return %c0_i32, %c0_i32_0 : i32, i32
  }
  func.func @transform_7(%arg0: i32, %arg1: i32) -> (i32, i32) {
    %c0_i32 = arith.constant 0 : i32
    %c0_i32_0 = arith.constant 0 : i32
    %c0_i32_1 = arith.constant 0 : i32
    return %c0_i32, %c0_i32_0 : i32, i32
  }
  func.func @transform_8(%arg0: i32, %arg1: i32) -> (i32, i32) {
    %c0_i32 = arith.constant 0 : i32
    %c0_i32_0 = arith.constant 0 : i32
    %c0_i32_1 = arith.constant 0 : i32
    return %c0_i32, %c0_i32_0 : i32, i32
  }
  func.func @transform_9(%arg0: i32, %arg1: i32) -> i32 {
    %c0_i32 = arith.constant 0 : i32
    %c0_i32_0 = arith.constant 0 : i32
    return %c0_i32 : i32
  }
  func.func @transform_10(%arg0: i32, %arg1: i32) -> (i32, i32, i32) {
    %c0_i32 = arith.constant 0 : i32
    %c0_i32_0 = arith.constant 0 : i32
    %c0_i32_1 = arith.constant 0 : i32
    return %arg0, %c0_i32, %c0_i32_0 : i32, i32, i32
  }
}

</mosaic_0001>

<llo_original>
// kernel: ne.18
$region0: #{ne.18}
  %s0 = inlined_call_operand.vmem [shape: s32[2,4,14], index: 0, kind: input, shape index: {}]
  %s1 = inlined_call_operand.vmem [shape: s32[2,56], index: 1, kind: output, shape index: {}]
  $region1: #{ne.18} parent=0
    #allocation0 [shape = 'u8[4096]{0}', space=vmem, size = 0x1000, scoped, tag = 'scoped mem for output reshape']
    #allocation1 [shape = 'u8[8192]{0}', space=vmem, size = 0x2000, scoped, tag = 'scoped mem for input reshape']
    %s3 = sshllo.u32 0, 4
    %s4 = scalar_lea.vmem %s0, 4
    %v5 = vld [vmem:[%s4] sm:%s3]
    %s6 = scalar_lea.vmem [#allocation1], 8
    %7 = vst [vmem:[%s6] sm:%s3] %v5
    %v8 = vld [vmem:[%s0] sm:%s3]
    %9 = vst [vmem:[#allocation1] sm:%s3] %v8
    %s10 = smov 3
    %v11 = vld [vmem:[#allocation1] ss:$8 sm:%s10]
    %vm12 = vcmask 113664
    %13 = vst.msk [vmem:[#allocation0] sm:$0x3] %vm12, %v11
    %s14 = scalar_lea.vmem [#allocation1], 3
    %s15 = smov 3
    %v16 = vld [vmem:[%s14] ss:$8 sm:%s15]
    %17 = vrot.lane.b32.xlu0 %v16, 42
    %v18 = vpop.permute.xlu0 %17
    %vm19 = vcmask 458064
    %20 = vst.msk [vmem:[#allocation0] sm:$0x3] %vm19, %v18
    %s21 = scalar_lea.vmem [#allocation1], 2
    %s22 = smov 3
    %v23 = vld [vmem:[%s21] ss:$8 sm:%s22]
    %24 = vrot.lane.b32.xlu0 %v23, 28
    %v25 = vpop.permute.xlu0 %24
    %vm26 = vcmask 343264
    %27 = vst.msk [vmem:[#allocation0] sm:$0x3] %vm26, %v25
    %s28 = scalar_lea.vmem [#allocation1], 1
    %s29 = smov 3
    %v30 = vld [vmem:[%s28] ss:$8 sm:%s29]
    %31 = vrot.lane.b32.xlu0 %v30, 14
    %v32 = vpop.permute.xlu0 %31
    %vm33 = vcmask 228464
    %34 = vst.msk [vmem:[#allocation0] sm:$0x3] %vm33, %v32
    %s36 = sshllo.u32 0, 2
    %v38 = vld [vmem:[#allocation0] sm:%s36]
    %s39 = sshllo.u32 0, 2
    %40 = vst [vmem:[%s1] sm:%s39] %v38

// kernel: tile.9
$region0: #{tile.9}
  %s0 = inlined_call_operand.vmem [shape: f32[4,14,14], index: 0, kind: input, shape index: {}]
  %s1 = inlined_call_operand.vmem [shape: f32[56,14], index: 1, kind: output, shape index: {}]
  $region1: #{tile.9} parent=0
    #allocation0 [shape = 'u8[57344]{0}', space=vmem, size = 0xe000, scoped, tag = 'scoped mem for input reshape']
    %s3 = sshllo.u32 0, 4
    %s4 = smul.addr 4, 13
    %s5 = scalar_lea.vmem %s0, %s4
    %v6 = vld [vmem:[%s5] sm:%s3]
    %s7 = scalar_lea.vmem [#allocation0], 104
    %8 = vst [vmem:[%s7] sm:%s3] %v6
    %s9 = smul.addr 4, 12
    %s10 = scalar_lea.vmem %s0, %s9
    %v11 = vld [vmem:[%s10] sm:%s3]
    %s12 = scalar_lea.vmem [#allocation0], 96
    %13 = vst [vmem:[%s12] sm:%s3] %v11
    %s14 = smul.addr 4, 11
    %s15 = scalar_lea.vmem %s0, %s14
    %v16 = vld [vmem:[%s15] sm:%s3]
    %s17 = scalar_lea.vmem [#allocation0], 88
    %18 = vst [vmem:[%s17] sm:%s3] %v16
    %s19 = smul.addr 4, 10
    %s20 = scalar_lea.vmem %s0, %s19
    %v21 = vld [vmem:[%s20] sm:%s3]
    %s22 = scalar_lea.vmem [#allocation0], 80
    %23 = vst [vmem:[%s22] sm:%s3] %v21
    %s24 = smul.addr 4, 9
    %s25 = scalar_lea.vmem %s0, %s24
    %v26 = vld [vmem:[%s25] sm:%s3]
    %s27 = scalar_lea.vmem [#allocation0], 72
    %28 = vst [vmem:[%s27] sm:%s3] %v26
    %s29 = smul.addr 4, 8
    %s30 = scalar_lea.vmem %s0, %s29
    %v31 = vld [vmem:[%s30] sm:%s3]
    %s32 = scalar_lea.vmem [#allocation0], 64
    %33 = vst [vmem:[%s32] sm:%s3] %v31
    %s34 = smul.addr 4, 7
    %s35 = scalar_lea.vmem %s0, %s34
    %v36 = vld [vmem:[%s35] sm:%s3]
    %s37 = scalar_lea.vmem [#allocation0], 56
    %38 = vst [vmem:[%s37] sm:%s3] %v36
    %s39 = smul.addr 4, 6
    %s40 = scalar_lea.vmem %s0, %s39
    %v41 = vld [vmem:[%s40] sm:%s3]
    %s42 = scalar_lea.vmem [#allocation0], 48
    %43 = vst [vmem:[%s42] sm:%s3] %v41
    %s44 = smul.addr 4, 5
    %s45 = scalar_lea.vmem %s0, %s44
    %v46 = vld [vmem:[%s45] sm:%s3]
    %s47 = scalar_lea.vmem [#allocation0], 40
    %48 = vst [vmem:[%s47] sm:%s3] %v46
    %s49 = smul.addr 4, 4
    %s50 = scalar_lea.vmem %s0, %s49
    %v51 = vld [vmem:[%s50] sm:%s3]
    %s52 = scalar_lea.vmem [#allocation0], 32
    %53 = vst [vmem:[%s52] sm:%s3] %v51
    %s54 = smul.addr 4, 3
    %s55 = scalar_lea.vmem %s0, %s54
    %v56 = vld [vmem:[%s55] sm:%s3]
    %s57 = scalar_lea.vmem [#allocation0], 24
    %58 = vst [vmem:[%s57] sm:%s3] %v56
    %s59 = smul.addr 4, 2
    %s60 = scalar_lea.vmem %s0, %s59
    %v61 = vld [vmem:[%s60] sm:%s3]
    %s62 = scalar_lea.vmem [#allocation0], 16
    %63 = vst [vmem:[%s62] sm:%s3] %v61
    %s64 = scalar_lea.vmem %s0, 4
    %v65 = vld [vmem:[%s64] sm:%s3]
    %s66 = scalar_lea.vmem [#allocation0], 8
    %67 = vst [vmem:[%s66] sm:%s3] %v65
    %v68 = vld [vmem:[%s0] sm:%s3]
    %69 = vst [vmem:[#allocation0] sm:%s3] %v68
    %v70 = vld [vmem:[#allocation0] ss:$8 sm:$0xf]
    %v71 = vld [vmem:[#allocation0] ss:$8 sm:$0xf0]
    %vm72 = vcmask 1047556
    %v73 = vsel %vm72, %v71, %v70
    %vm74 = vcmask 113664
    %75 = vst.msk [vmem:[%s1] sm:$0xff] %vm74, %v73
    %s76 = scalar_lea.vmem [#allocation0], 64
    %v77 = vld [vmem:[%s76] ss:$8 sm:$0xf]
    %s78 = scalar_lea.vmem [#allocation0], 64
    %s79 = smov 48
    %v80 = vld [vmem:[%s78] ss:$8 sm:%s79]
    %vm81 = vcmask 1045508
    %v82 = vsel %vm81, %v80, %v77
    %vm83 = vcmask 113664
    %s84 = scalar_lea.vmem %s1, 8
    %85 = vst.msk [vmem:[%s84] sm:$0x3f] %vm83, %v82
    %s86 = scalar_lea.vmem [#allocation0], 3
    %v87 = vld [vmem:[%s86] ss:$8 sm:$0xf]
    %s88 = scalar_lea.vmem [#allocation0], 3
    %v89 = vld [vmem:[%s88] ss:$8 sm:$0xf0]
    %vm90 = vcmask 1047556
    %v91 = vsel %vm90, %v89, %v87
    %92 = vrot.lane.b32.xlu0 %v91, 42
    %v93 = vpop.permute.xlu0 %92
    %vm94 = vcmask 458064
    %95 = vst.msk [vmem:[%s1] sm:$0xff] %vm94, %v93
    %s96 = scalar_lea.vmem [#allocation0], 67
    %v97 = vld [vmem:[%s96] ss:$8 sm:$0xf]
    %s98 = scalar_lea.vmem [#allocation0], 67
    %s99 = smov 48
    %v100 = vld [vmem:[%s98] ss:$8 sm:%s99]
    %vm101 = vcmask 1045508
    %v102 = vsel %vm101, %v100, %v97
    %103 = vrot.lane.b32.xlu0 %v102, 42
    %v104 = vpop.permute.xlu0 %103
    %vm105 = vcmask 458064
    %s106 = scalar_lea.vmem %s1, 8
    %107 = vst.msk [vmem:[%s106] sm:$0x3f] %vm105, %v104
    %s108 = scalar_lea.vmem [#allocation0], 2
    %v109 = vld [vmem:[%s108] ss:$8 sm:$0xf]
    %s110 = scalar_lea.vmem [#allocation0], 2
    %v111 = vld [vmem:[%s110] ss:$8 sm:$0xf0]
    %vm112 = vcmask 1047556
    %v113 = vsel %vm112, %v111, %v109
    %114 = vrot.lane.b32.xlu0 %v113, 28
    %v115 = vpop.permute.xlu0 %114
    %vm116 = vcmask 343264
    %117 = vst.msk [vmem:[%s1] sm:$0xff] %vm116, %v115
    %s118 = scalar_lea.vmem [#allocation0], 66
    %v119 = vld [vmem:[%s118] ss:$8 sm:$0xf]
    %s120 = scalar_lea.vmem [#allocation0], 66
    %s121 = smov 48
    %v122 = vld [vmem:[%s120] ss:$8 sm:%s121]
    %vm123 = vcmask 1045508
    %v124 = vsel %vm123, %v122, %v119
    %125 = vrot.lane.b32.xlu0 %v124, 28
    %v126 = vpop.permute.xlu0 %125
    %vm127 = vcmask 343264
    %s128 = scalar_lea.vmem %s1, 8
    %129 = vst.msk [vmem:[%s128] sm:$0x3f] %vm127, %v126
    %s130 = scalar_lea.vmem [#allocation0], 1
    %v131 = vld [vmem:[%s130] ss:$8 sm:$0xf]
    %s132 = scalar_lea.vmem [#allocation0], 1
    %v133 = vld [vmem:[%s132] ss:$8 sm:$0xf0]
    %vm134 = vcmask 1047556
    %v135 = vsel %vm134, %v133, %v131
    %136 = vrot.lane.b32.xlu0 %v135, 14
    %v137 = vpop.permute.xlu0 %136
    %vm138 = vcmask 228464
    %139 = vst.msk [vmem:[%s1] sm:$0xff] %vm138, %v137
    %s140 = scalar_lea.vmem [#allocation0], 65
    %v141 = vld [vmem:[%s140] ss:$8 sm:$0xf]
    %s142 = scalar_lea.vmem [#allocation0], 65
    %s143 = smov 48
    %v144 = vld [vmem:[%s142] ss:$8 sm:%s143]
    %vm145 = vcmask 1045508
    %v146 = vsel %vm145, %v144, %v141
    %147 = vrot.lane.b32.xlu0 %v146, 14
    %v148 = vpop.permute.xlu0 %147
    %vm149 = vcmask 228464
    %s150 = scalar_lea.vmem %s1, 8
    %151 = vst.msk [vmem:[%s150] sm:$0x3f] %vm149, %v148

// kernel: pipool_forward.1
$region0: #{pipool_forward.1}
  #allocation0 [shape = 'u32[]', space=smem, size = 0x4, offset = 0x4, fixed_abs, tag = 'smem constant byte address 0x4 - core index']
  #allocation1 [shape = 'u32[144,128]{1,0:T(1,128)}', space=vmem, size = 0x12000, scoped, tag = 'internal scratch']
  #allocation2 [shape = 'f32[56,14]{1,0:T(8,128)}', space=vmem, size = 0x7000, scoped, tag = 'scratch operand']
  #allocation3 [shape = 'f32[56,14]{1,0:T(8,128)}', space=vmem, size = 0x7000, scoped, tag = 'scratch operand']
  #allocation4 [shape = 'f32[14,14]{1,0:T(8,128)}', space=vmem, size = 0x2000, scoped, tag = 'scratch operand']
  %s0 = inlined_call_operand.vmem [shape: f32[2,4,14,8], index: 0, kind: input, shape index: {}]
  %s1 = inlined_call_operand.vmem [shape: f32[2,4,14,8], index: 1, kind: input, shape index: {}]
  %s2 = inlined_call_operand.vmem [shape: f32[2,56,8], index: 2, kind: input, shape index: {}]
  %s3 = inlined_call_operand.vmem [shape: f32[2,56,8], index: 3, kind: input, shape index: {}]
  %s4 = inlined_call_operand.vmem [shape: s8[2,4,14,56], index: 4, kind: input, shape index: {}]
  %s5 = inlined_call_operand.vmem [shape: s8[2,4,14,56], index: 5, kind: input, shape index: {}]
  %s6 = inlined_call_operand.vmem [shape: f32[8,1], index: 6, kind: input, shape index: {}]
  %s7 = inlined_call_operand.vmem [shape: f32[8,1], index: 7, kind: input, shape index: {}]
  %s8 = inlined_call_operand.vmem [shape: f32[56,14], index: 8, kind: input, shape index: {}]
  %s9 = inlined_call_operand.vmem [shape: f32[2], index: 9, kind: input, shape index: {}]
  %s10 = inlined_call_operand.vmem [shape: f32[2,14,14], index: 10, kind: output, shape index: {}]
  %s11 = sld [smem:[#allocation0]]
  $region85: #{pipool_forward.1} parent=0
    _
  %s13 = ssub.s32 1, %s11
  %s14 = scalar_select 0, %s13, %s11
  $region1: #{pipool_forward.1} parent=0
    #allocation5 [shape = 'u8[512]{0}', space=smem, size = 0x200, scoped, tag = 'input window, operand 9, single buffered']
    #allocation6 [shape = 's32[2]{0}', space=sflag, size = 0x8, scoped, tag = 'scoped memory for pipool_forward.1']
    %15 = vsyncpa [#allocation6], 0
    loop: start=0, step=1, limit=10
    $region2: #{pipool_forward.1} parent=1 // loop_pre_header
      _
    $region3: #{pipool_forward.1} parent=1 // loop_header
      %s17 = sphi 0, %s21
      %p18 = scmp.ge.s32.totalorder %s17, 10
      %s24 = sphi 0, %s36
      %s25 = sphi 0, %s32
      %s26 = sphi 0, %s24
      %s27 = sphi 0, %s25
      %s28 = sphi 0, %s26
      %s29 = sphi 0, %s27
      %s41 = sphi 0, %s43
      %s44 = sphi 0, %s41
      %s45 = sphi 0, %s44
      %s61 = sphi 0, %s45
      %s69 = sphi 0, %s71
      %s72 = sphi 0, %s69
      %s73 = sphi 0, %s72
      %s89 = sphi 0, %s73
      %s95 = sphi 0, %s97
      %s98 = sphi 0, %s95
      %s99 = sphi 0, %s98
      %s115 = sphi 0, %s99
      %s121 = sphi 0, %s123
      %s124 = sphi 0, %s121
      %s125 = sphi 0, %s124
      %s141 = sphi 0, %s125
      %s149 = sphi 0, %s151
      %s152 = sphi 0, %s149
      %s153 = sphi 0, %s152
      %s169 = sphi 0, %s153
      %s177 = sphi 0, %s179
      %s180 = sphi 0, %s177
      %s181 = sphi 0, %s180
      %s197 = sphi 0, %s181
      %s201 = sphi 0, %s201
      %s203 = sphi 0, %s201
      %s204 = sphi 0, %s203
      %s218 = sphi 0, %s204
      %s222 = sphi 0, %s222
      %s224 = sphi 0, %s222
      %s225 = sphi 0, %s224
      %s239 = sphi 0, %s225
      %s243 = sphi 0, %s243
      %s245 = sphi 0, %s243
      %s246 = sphi 0, %s245
      %s260 = sphi 0, %s246
      %s264 = sphi 0, %s264
      %s266 = sphi 0, %s264
      %s267 = sphi 0, %s266
      %s281 = sphi 0, %s267
      %s287 = sphi 0, %s289
      %s290 = sphi 0, %s287
      %s291 = sphi 0, %s290
      %s307 = sphi 0, %s291
    $region4: #{pipool_forward.1} parent=1 // loop_header_branch
      %20 = sbr.rel (%p18) target = $region8
    $region5: #{pipool_forward.1} parent=1 // loop_body
      %s22 = ssub.s32 %s17, 1
      %s23 = ssub.s32 %s17, 2
      %s30 = sadd.s32 1, %s25
      %p31 = scmp.ge.s32.totalorder %s30, 4
      %s32 = scalar_select %p31, 0, %s30
      %s33 = sadd.s32 1, %s24
      %s34 = scalar_select %p31, %s33, %s24
      %p35 = scmp.ge.s32.totalorder %s34, 2
      %s36 = scalar_select %p35, 0, %s34
      %s37 = ssub.s32 %s24, %s36
      %s38 = ssub.s32 %s25, %s32
      %s39 = sor.u32 %s37, %s38
      %p40 = scmp.eq.s32.totalorder %s39, 0
      %s42 = sadd.s32 %s41, 1
      %s43 = scalar_select %p40, %s41, %s42
      %p46 = pneg %p40
      %p47 = scmp.eq.s32.totalorder %s17, 7
      %p48 = por %p46, %p47
      %p49 = scmp.ne.s32.totalorder %s41, %s44
      %p50 = scmp.eq.s32.totalorder %s17, 0
      %p51 = por %p49, %p50
      %p52 = scmp.ne.s32.totalorder %s41, %s44
      %p53 = scmp.eq.s32.totalorder %s22, 7
      %p54 = por %p52, %p53
      %p55 = scmp.ne.s32.totalorder %s44, %s45
      %p56 = scmp.eq.s32.totalorder %s22, 0
      %p57 = por %p55, %p56
      %p58 = scmp.ne.s32.totalorder %s44, %s45
      %p59 = scmp.eq.s32.totalorder %s23, 7
      %p60 = por %p58, %p59
      %p62 = scmp.ne.s32.totalorder %s45, %s61
      %p63 = scmp.eq.s32.totalorder %s23, 0
      %p64 = por %p62, %p63
      %s65 = ssub.s32 %s24, %s36
      %s66 = ssub.s32 %s25, %s32
      %s67 = sor.u32 %s65, %s66
      %p68 = scmp.eq.s32.totalorder %s67, 0
      %s70 = sadd.s32 %s69, 1
      %s71 = scalar_select %p68, %s69, %s70
      %p74 = pneg %p68
      %p75 = scmp.eq.s32.totalorder %s17, 7
      %p76 = por %p74, %p75
      %p77 = scmp.ne.s32.totalorder %s69, %s72
      %p78 = scmp.eq.s32.totalorder %s17, 0
      %p79 = por %p77, %p78
      %p80 = scmp.ne.s32.totalorder %s69, %s72
      %p81 = scmp.eq.s32.totalorder %s22, 7
      %p82 = por %p80, %p81
      %p83 = scmp.ne.s32.totalorder %s72, %s73
      %p84 = scmp.eq.s32.totalorder %s22, 0
      %p85 = por %p83, %p84
      %p86 = scmp.ne.s32.totalorder %s72, %s73
      %p87 = scmp.eq.s32.totalorder %s23, 7
      %p88 = por %p86, %p87
      %p90 = scmp.ne.s32.totalorder %s73, %s89
      %p91 = scmp.eq.s32.totalorder %s23, 0
      %p92 = por %p90, %p91
      %s93 = ssub.s32 %s24, %s36
      %p94 = scmp.eq.s32.totalorder %s93, 0
      %s96 = sadd.s32 %s95, 1
      %s97 = scalar_select %p94, %s95, %s96
      %p100 = pneg %p94
      %p101 = scmp.eq.s32.totalorder %s17, 7
      %p102 = por %p100, %p101
      %p103 = scmp.ne.s32.totalorder %s95, %s98
      %p104 = scmp.eq.s32.totalorder %s17, 0
      %p105 = por %p103, %p104
      %p106 = scmp.ne.s32.totalorder %s95, %s98
      %p107 = scmp.eq.s32.totalorder %s22, 7
      %p108 = por %p106, %p107
      %p109 = scmp.ne.s32.totalorder %s98, %s99
      %p110 = scmp.eq.s32.totalorder %s22, 0
      %p111 = por %p109, %p110
      %p112 = scmp.ne.s32.totalorder %s98, %s99
      %p113 = scmp.eq.s32.totalorder %s23, 7
      %p114 = por %p112, %p113
      %p116 = scmp.ne.s32.totalorder %s99, %s115
      %p117 = scmp.eq.s32.totalorder %s23, 0
      %p118 = por %p116, %p117
      %s119 = ssub.s32 %s24, %s36
      %p120 = scmp.eq.s32.totalorder %s119, 0
      %s122 = sadd.s32 %s121, 1
      %s123 = scalar_select %p120, %s121, %s122
      %p126 = pneg %p120
      %p127 = scmp.eq.s32.totalorder %s17, 7
      %p128 = por %p126, %p127
      %p129 = scmp.ne.s32.totalorder %s121, %s124
      %p130 = scmp.eq.s32.totalorder %s17, 0
      %p131 = por %p129, %p130
      %p132 = scmp.ne.s32.totalorder %s121, %s124
      %p133 = scmp.eq.s32.totalorder %s22, 7
      %p134 = por %p132, %p133
      %p135 = scmp.ne.s32.totalorder %s124, %s125
      %p136 = scmp.eq.s32.totalorder %s22, 0
      %p137 = por %p135, %p136
      %p138 = scmp.ne.s32.totalorder %s124, %s125
      %p139 = scmp.eq.s32.totalorder %s23, 7
      %p140 = por %p138, %p139
      %p142 = scmp.ne.s32.totalorder %s125, %s141
      %p143 = scmp.eq.s32.totalorder %s23, 0
      %p144 = por %p142, %p143
      %s145 = ssub.s32 %s24, %s36
      %s146 = ssub.s32 %s25, %s32
      %s147 = sor.u32 %s145, %s146
      %p148 = scmp.eq.s32.totalorder %s147, 0
      %s150 = sadd.s32 %s149, 1
      %s151 = scalar_select %p148, %s149, %s150
      %p154 = pneg %p148
      %p155 = scmp.eq.s32.totalorder %s17, 7
      %p156 = por %p154, %p155
      %p157 = scmp.ne.s32.totalorder %s149, %s152
      %p158 = scmp.eq.s32.totalorder %s17, 0
      %p159 = por %p157, %p158
      %p160 = scmp.ne.s32.totalorder %s149, %s152
      %p161 = scmp.eq.s32.totalorder %s22, 7
      %p162 = por %p160, %p161
      %p163 = scmp.ne.s32.totalorder %s152, %s153
      %p164 = scmp.eq.s32.totalorder %s22, 0
      %p165 = por %p163, %p164
      %p166 = scmp.ne.s32.totalorder %s152, %s153
      %p167 = scmp.eq.s32.totalorder %s23, 7
      %p168 = por %p166, %p167
      %p170 = scmp.ne.s32.totalorder %s153, %s169
      %p171 = scmp.eq.s32.totalorder %s23, 0
      %p172 = por %p170, %p171
      %s173 = ssub.s32 %s24, %s36
      %s174 = ssub.s32 %s25, %s32
      %s175 = sor.u32 %s173, %s174
      %p176 = scmp.eq.s32.totalorder %s175, 0
      %s178 = sadd.s32 %s177, 1
      %s179 = scalar_select %p176, %s177, %s178
      %p182 = pneg %p176
      %p183 = scmp.eq.s32.totalorder %s17, 7
      %p184 = por %p182, %p183
      %p185 = scmp.ne.s32.totalorder %s177, %s180
      %p186 = scmp.eq.s32.totalorder %s17, 0
      %p187 = por %p185, %p186
      %p188 = scmp.ne.s32.totalorder %s177, %s180
      %p189 = scmp.eq.s32.totalorder %s22, 7
      %p190 = por %p188, %p189
      %p191 = scmp.ne.s32.totalorder %s180, %s181
      %p192 = scmp.eq.s32.totalorder %s22, 0
      %p193 = por %p191, %p192
      %p194 = scmp.ne.s32.totalorder %s180, %s181
      %p195 = scmp.eq.s32.totalorder %s23, 7
      %p196 = por %p194, %p195
      %p198 = scmp.ne.s32.totalorder %s181, %s197
      %p199 = scmp.eq.s32.totalorder %s23, 0
      %p200 = por %p198, %p199
      %s202 = sadd.s32 %s201, 1
      %p205 = scmp.eq.s32.totalorder %s17, 7
      %p206 = scmp.ne.s32.totalorder %s201, %s203
      %p207 = scmp.eq.s32.totalorder %s17, 0
      %p208 = por %p206, %p207
      %p209 = scmp.ne.s32.totalorder %s201, %s203
      %p210 = scmp.eq.s32.totalorder %s22, 7
      %p211 = por %p209, %p210
      %p212 = scmp.ne.s32.totalorder %s203, %s204
      %p213 = scmp.eq.s32.totalorder %s22, 0
      %p214 = por %p212, %p213
      %p215 = scmp.ne.s32.totalorder %s203, %s204
      %p216 = scmp.eq.s32.totalorder %s23, 7
      %p217 = por %p215, %p216
      %p219 = scmp.ne.s32.totalorder %s204, %s218
      %p220 = scmp.eq.s32.totalorder %s23, 0
      %p221 = por %p219, %p220
      %s223 = sadd.s32 %s222, 1
      %p226 = scmp.eq.s32.totalorder %s17, 7
      %p227 = scmp.ne.s32.totalorder %s222, %s224
      %p228 = scmp.eq.s32.totalorder %s17, 0
      %p229 = por %p227, %p228
      %p230 = scmp.ne.s32.totalorder %s222, %s224
      %p231 = scmp.eq.s32.totalorder %s22, 7
      %p232 = por %p230, %p231
      %p233 = scmp.ne.s32.totalorder %s224, %s225
      %p234 = scmp.eq.s32.totalorder %s22, 0
      %p235 = por %p233, %p234
      %p236 = scmp.ne.s32.totalorder %s224, %s225
      %p237 = scmp.eq.s32.totalorder %s23, 7
      %p238 = por %p236, %p237
      %p240 = scmp.ne.s32.totalorder %s225, %s239
      %p241 = scmp.eq.s32.totalorder %s23, 0
      %p242 = por %p240, %p241
      %s244 = sadd.s32 %s243, 1
      %p247 = scmp.eq.s32.totalorder %s17, 7
      %p248 = scmp.ne.s32.totalorder %s243, %s245
      %p249 = scmp.eq.s32.totalorder %s17, 0
      %p250 = por %p248, %p249
      %p251 = scmp.ne.s32.totalorder %s243, %s245
      %p252 = scmp.eq.s32.totalorder %s22, 7
      %p253 = por %p251, %p252
      %p254 = scmp.ne.s32.totalorder %s245, %s246
      %p255 = scmp.eq.s32.totalorder %s22, 0
      %p256 = por %p254, %p255
      %p257 = scmp.ne.s32.totalorder %s245, %s246
      %p258 = scmp.eq.s32.totalorder %s23, 7
      %p259 = por %p257, %p258
      %p261 = scmp.ne.s32.totalorder %s246, %s260
      %p262 = scmp.eq.s32.totalorder %s23, 0
      %p263 = por %p261, %p262
      %s265 = sadd.s32 %s264, 1
      %p268 = scmp.eq.s32.totalorder %s17, 7
      %p269 = scmp.ne.s32.totalorder %s264, %s266
      %p270 = scmp.eq.s32.totalorder %s17, 0
      %p271 = por %p269, %p270
      %p272 = scmp.ne.s32.totalorder %s264, %s266
      %p273 = scmp.eq.s32.totalorder %s22, 7
      %p274 = por %p272, %p273
      %p275 = scmp.ne.s32.totalorder %s266, %s267
      %p276 = scmp.eq.s32.totalorder %s22, 0
      %p277 = por %p275, %p276
      %p278 = scmp.ne.s32.totalorder %s266, %s267
      %p279 = scmp.eq.s32.totalorder %s23, 7
      %p280 = por %p278, %p279
      %p282 = scmp.ne.s32.totalorder %s267, %s281
      %p283 = scmp.eq.s32.totalorder %s23, 0
      %p284 = por %p282, %p283
      %s285 = ssub.s32 %s24, %s36
      %p286 = scmp.eq.s32.totalorder %s285, 0
      %s288 = sadd.s32 %s287, 1
      %s289 = scalar_select %p286, %s287, %s288
      %p292 = pneg %p286
      %p293 = scmp.eq.s32.totalorder %s17, 7
      %p294 = por %p292, %p293
      %p295 = scmp.ne.s32.totalorder %s287, %s290
      %p296 = scmp.eq.s32.totalorder %s17, 0
      %p297 = por %p295, %p296
      %p298 = scmp.ne.s32.totalorder %s287, %s290
      %p299 = scmp.eq.s32.totalorder %s22, 7
      %p300 = por %p298, %p299
      %p301 = scmp.ne.s32.totalorder %s290, %s291
      %p302 = scmp.eq.s32.totalorder %s22, 0
      %p303 = por %p301, %p302
      %p304 = scmp.ne.s32.totalorder %s290, %s291
      %p305 = scmp.eq.s32.totalorder %s23, 7
      %p306 = por %p304, %p305
      %p308 = scmp.ne.s32.totalorder %s291, %s307
      %p309 = scmp.eq.s32.totalorder %s23, 0
      %p310 = por %p308, %p309
      %p311 = scmp.le.s32.totalorder 1, %s17
      %p312 = scmp.lt.s32.totalorder %s17, 9
      %p313 = pnand %p311, %p312
      %p314 = pneg %p313
      // Predicated region
      $region9: #{pipool_forward.1} parent=5 // pred_check
        _
      $region10: #{pipool_forward.1} parent=5 // pred_check_branch
        %316 = sbr.rel (%p313) target = $region12
      $region11: #{pipool_forward.1} parent=5 // pred_region
        %s317 = ssub.s32 %s17, 1
        // Predicated region
        $region13: #{pipool_forward.1} parent=11 // pred_check
          %p318 = pneg %p214
        $region14: #{pipool_forward.1} parent=11 // pred_check_branch
          %320 = sbr.rel (%p318) target = $region16
        $region15: #{pipool_forward.1} parent=11 // pred_region
          _
        $region16: #{pipool_forward.1} parent=11 // pred_fallthru
          _
        // Predicated region
        $region17: #{pipool_forward.1} parent=11 // pred_check
          %p321 = pneg %p235
        $region18: #{pipool_forward.1} parent=11 // pred_check_branch
          %323 = sbr.rel (%p321) target = $region20
        $region19: #{pipool_forward.1} parent=11 // pred_region
          _
        $region20: #{pipool_forward.1} parent=11 // pred_fallthru
          _
        // Predicated region
        $region21: #{pipool_forward.1} parent=11 // pred_check
          %p324 = pneg %p256
        $region22: #{pipool_forward.1} parent=11 // pred_check_branch
          %326 = sbr.rel (%p324) target = $region24
        $region23: #{pipool_forward.1} parent=11 // pred_region
          _
        $region24: #{pipool_forward.1} parent=11 // pred_fallthru
          _
        // Predicated region
        $region25: #{pipool_forward.1} parent=11 // pred_check
          %p327 = pneg %p277
        $region26: #{pipool_forward.1} parent=11 // pred_check_branch
          %329 = sbr.rel (%p327) target = $region28
        $region27: #{pipool_forward.1} parent=11 // pred_region
          %s331 = ssub.s32 16, 16
          %332 = vsyncadd [#allocation6], %s331
          %s334 = sshll.u32 %s9, 4
          %s335 = int_to_ptr.vmem [resolvable:$true] %s334
          %337 = dma.vmem_to_smem %s335, 16, [#allocation5], [#allocation6]
        $region28: #{pipool_forward.1} parent=11 // pred_fallthru
          _
      $region12: #{pipool_forward.1} parent=5 // pred_fallthru
        _
      %p338 = scmp.lt.s32.totalorder %s17, 8
      // Predicated region
      $region29: #{pipool_forward.1} parent=5 // pred_check
        %p339 = pneg %p338
      $region30: #{pipool_forward.1} parent=5 // pred_check_branch
        %341 = sbr.rel (%p339) target = $region32
      $region31: #{pipool_forward.1} parent=5 // pred_region
        // Predicated region
        $region33: #{pipool_forward.1} parent=31 // pred_check
          %p342 = pneg %p51
        $region34: #{pipool_forward.1} parent=31 // pred_check_branch
          %344 = sbr.rel (%p342) target = $region36
        $region35: #{pipool_forward.1} parent=31 // pred_region
          %p345 = scmp.lt.s32.totalorder %s24, 1
          %s346 = scalar_select %p345, %s24, 1
          %p347 = scmp.lt.s32.totalorder %s25, 3
          %s348 = scalar_select %p347, %s25, 3
          %s349 = smul.addr %s348, 2
          %s350 = smul.addr %s346, 8
          %s351 = sadd.s32 %s349, %s350
          %s352 = smul.addr %s351, 8
          %s353 = scalar_lea.vmem %s0, %s352
        $region36: #{pipool_forward.1} parent=31 // pred_fallthru
          _
        // Predicated region
        $region37: #{pipool_forward.1} parent=31 // pred_check
          %p354 = pneg %p79
        $region38: #{pipool_forward.1} parent=31 // pred_check_branch
          %356 = sbr.rel (%p354) target = $region40
        $region39: #{pipool_forward.1} parent=31 // pred_region
          %p357 = scmp.lt.s32.totalorder %s24, 1
          %s358 = scalar_select %p357, %s24, 1
          %p359 = scmp.lt.s32.totalorder %s25, 3
          %s360 = scalar_select %p359, %s25, 3
          %s361 = smul.addr %s360, 2
          %s362 = smul.addr %s358, 8
          %s363 = sadd.s32 %s361, %s362
          %s364 = smul.addr %s363, 8
          %s365 = scalar_lea.vmem %s1, %s364
        $region40: #{pipool_forward.1} parent=31 // pred_fallthru
          _
        // Predicated region
        $region41: #{pipool_forward.1} parent=31 // pred_check
          %p366 = pneg %p105
        $region42: #{pipool_forward.1} parent=31 // pred_check_branch
          %368 = sbr.rel (%p366) target = $region44
        $region43: #{pipool_forward.1} parent=31 // pred_region
          %p369 = scmp.lt.s32.totalorder %s24, 1
          %s370 = scalar_select %p369, %s24, 1
          %s371 = smul.addr %s370, 7
          %s372 = smul.addr %s371, 8
          %s373 = scalar_lea.vmem %s2, %s372
        $region44: #{pipool_forward.1} parent=31 // pred_fallthru
          _
        // Predicated region
        $region45: #{pipool_forward.1} parent=31 // pred_check
          %p374 = pneg %p131
        $region46: #{pipool_forward.1} parent=31 // pred_check_branch
          %376 = sbr.rel (%p374) target = $region48
        $region47: #{pipool_forward.1} parent=31 // pred_region
          %p377 = scmp.lt.s32.totalorder %s24, 1
          %s378 = scalar_select %p377, %s24, 1
          %s379 = smul.addr %s378, 7
          %s380 = smul.addr %s379, 8
          %s381 = scalar_lea.vmem %s3, %s380
        $region48: #{pipool_forward.1} parent=31 // pred_fallthru
          _
        // Predicated region
        $region49: #{pipool_forward.1} parent=31 // pred_check
          %p382 = pneg %p159
        $region50: #{pipool_forward.1} parent=31 // pred_check_branch
          %384 = sbr.rel (%p382) target = $region52
        $region51: #{pipool_forward.1} parent=31 // pred_region
          %p385 = scmp.lt.s32.totalorder %s24, 1
          %s386 = scalar_select %p385, %s24, 1
          %p387 = scmp.lt.s32.totalorder %s25, 3
          %s388 = scalar_select %p387, %s25, 3
          %s389 = smul.addr %s388, 2
          %s390 = smul.addr %s386, 8
          %s391 = sadd.s32 %s389, %s390
          %s392 = smul.addr %s391, 2
          %s393 = scalar_lea.vmem %s4, %s392
        $region52: #{pipool_forward.1} parent=31 // pred_fallthru
          _
        // Predicated region
        $region53: #{pipool_forward.1} parent=31 // pred_check
          %p394 = pneg %p187
        $region54: #{pipool_forward.1} parent=31 // pred_check_branch
          %396 = sbr.rel (%p394) target = $region56
        $region55: #{pipool_forward.1} parent=31 // pred_region
          %p397 = scmp.lt.s32.totalorder %s24, 1
          %s398 = scalar_select %p397, %s24, 1
          %p399 = scmp.lt.s32.totalorder %s25, 3
          %s400 = scalar_select %p399, %s25, 3
          %s401 = smul.addr %s400, 2
          %s402 = smul.addr %s398, 8
          %s403 = sadd.s32 %s401, %s402
          %s404 = smul.addr %s403, 2
          %s405 = scalar_lea.vmem %s5, %s404
        $region56: #{pipool_forward.1} parent=31 // pred_fallthru
          _
      $region32: #{pipool_forward.1} parent=5 // pred_fallthru
        _
      %p406 = scmp.le.s32.totalorder 1, %s17
      %p407 = scmp.lt.s32.totalorder %s17, 9
      %p408 = pnand %p406, %p407
      %p409 = pneg %p408
      // Predicated region
      $region57: #{pipool_forward.1} parent=5 // pred_check
        _
      $region58: #{pipool_forward.1} parent=5 // pred_check_branch
        %411 = sbr.rel (%p408) target = $region60
      $region59: #{pipool_forward.1} parent=5 // pred_region
        %s412 = ssub.s32 %s17, 1
        // Predicated region
        $region61: #{pipool_forward.1} parent=59 // pred_check
          %p413 = pneg %p277
        $region62: #{pipool_forward.1} parent=59 // pred_check_branch
          %415 = sbr.rel (%p413) target = $region64
        $region63: #{pipool_forward.1} parent=59 // pred_region
          %416 = dma.done [#allocation6], 16
        $region64: #{pipool_forward.1} parent=59 // pred_fallthru
          _
        %417 = sfence
        %p418 = scmp.lt.s32.totalorder %s26, 1
        %s419 = scalar_select %p418, %s26, 1
        %p420 = scmp.lt.s32.totalorder %s27, 3
        %s421 = scalar_select %p420, %s27, 3
        %s422 = smul.addr %s421, 2
        %s423 = smul.addr %s419, 8
        %s424 = sadd.s32 %s422, %s423
        %s425 = smul.addr %s424, 8
        %s426 = scalar_lea.vmem %s0, %s425
        %p427 = pneg %p57
        %p428 = pneg %p54
        %p429 = scmp.lt.s32.totalorder %s26, 1
        %s430 = scalar_select %p429, %s26, 1
        %p431 = scmp.lt.s32.totalorder %s27, 3
        %s432 = scalar_select %p431, %s27, 3
        %s433 = smul.addr %s432, 2
        %s434 = smul.addr %s430, 8
        %s435 = sadd.s32 %s433, %s434
        %s436 = smul.addr %s435, 8
        %s437 = scalar_lea.vmem %s1, %s436
        %p438 = pneg %p85
        %p439 = pneg %p82
        %p440 = scmp.lt.s32.totalorder %s26, 1
        %s441 = scalar_select %p440, %s26, 1
        %s442 = smul.addr %s441, 7
        %s443 = smul.addr %s442, 8
        %s444 = scalar_lea.vmem %s2, %s443
        %p445 = pneg %p111
        %p446 = pneg %p108
        %p447 = scmp.lt.s32.totalorder %s26, 1
        %s448 = scalar_select %p447, %s26, 1
        %s449 = smul.addr %s448, 7
        %s450 = smul.addr %s449, 8
        %s451 = scalar_lea.vmem %s3, %s450
        %p452 = pneg %p137
        %p453 = pneg %p134
        %p454 = scmp.lt.s32.totalorder %s26, 1
        %s455 = scalar_select %p454, %s26, 1
        %p456 = scmp.lt.s32.totalorder %s27, 3
        %s457 = scalar_select %p456, %s27, 3
        %s458 = smul.addr %s457, 2
        %s459 = smul.addr %s455, 8
        %s460 = sadd.s32 %s458, %s459
        %s461 = smul.addr %s460, 2
        %s462 = scalar_lea.vmem %s4, %s461
        %p463 = pneg %p165
        %p464 = pneg %p162
        %p465 = scmp.lt.s32.totalorder %s26, 1
        %s466 = scalar_select %p465, %s26, 1
        %p467 = scmp.lt.s32.totalorder %s27, 3
        %s468 = scalar_select %p467, %s27, 3
        %s469 = smul.addr %s468, 2
        %s470 = smul.addr %s466, 8
        %s471 = sadd.s32 %s469, %s470
        %s472 = smul.addr %s471, 2
        %s473 = scalar_lea.vmem %s5, %s472
        %p474 = pneg %p193
        %p475 = pneg %p190
        %p476 = pneg %p214
        %p477 = pneg %p211
        %p478 = pneg %p235
        %p479 = pneg %p232
        %p480 = pneg %p256
        %p481 = pneg %p253
        %p482 = pneg %p277
        %p483 = pneg %p274
        %p484 = pneg %p303
        %p485 = pneg %p300
        %p486 = scmp.lt.s32.totalorder %s26, 1
        %s487 = scalar_select %p486, %s26, 1
        %s488 = smul.addr %s487, 2
        %s489 = smul.addr %s488, 8
        %s490 = scalar_lea.vmem %s10, %s489
        %p491 = scmp.lt.s32.totalorder %s26, 1
        %s492 = scalar_select %p491, %s26, 1
        %p493 = scmp.lt.s32.totalorder %s27, 3
        %s494 = scalar_select %p493, %s27, 3
        %s495 = smul.addr %s494, 2
        %s496 = smul.addr %s492, 8
        %s497 = sadd.s32 %s495, %s496
        %s498 = smul.addr %s497, 8
        %s499 = scalar_lea.vmem %s0, %s498
        %p500 = scmp.lt.s32.totalorder %s26, 1
        %s501 = scalar_select %p500, %s26, 1
        %p502 = scmp.lt.s32.totalorder %s27, 3
        %s503 = scalar_select %p502, %s27, 3
        %s504 = smul.addr %s503, 2
        %s505 = smul.addr %s501, 8
        %s506 = sadd.s32 %s504, %s505
        %s507 = smul.addr %s506, 8
        %s508 = scalar_lea.vmem %s1, %s507
        %p509 = scmp.lt.s32.totalorder %s26, 1
        %s510 = scalar_select %p509, %s26, 1
        %s511 = smul.addr %s510, 7
        %s512 = smul.addr %s511, 8
        %s513 = scalar_lea.vmem %s2, %s512
        %p514 = scmp.lt.s32.totalorder %s26, 1
        %s515 = scalar_select %p514, %s26, 1
        %s516 = smul.addr %s515, 7
        %s517 = smul.addr %s516, 8
        %s518 = scalar_lea.vmem %s3, %s517
        %p519 = scmp.lt.s32.totalorder %s26, 1
        %s520 = scalar_select %p519, %s26, 1
        %p521 = scmp.lt.s32.totalorder %s27, 3
        %s522 = scalar_select %p521, %s27, 3
        %s523 = smul.addr %s522, 2
        %s524 = smul.addr %s520, 8
        %s525 = sadd.s32 %s523, %s524
        %s526 = smul.addr %s525, 2
        %s527 = scalar_lea.vmem %s4, %s526
        %p528 = scmp.lt.s32.totalorder %s26, 1
        %s529 = scalar_select %p528, %s26, 1
        %p530 = scmp.lt.s32.totalorder %s27, 3
        %s531 = scalar_select %p530, %s27, 3
        %s532 = smul.addr %s531, 2
        %s533 = smul.addr %s529, 8
        %s534 = sadd.s32 %s532, %s533
        %s535 = smul.addr %s534, 2
        %s536 = scalar_lea.vmem %s5, %s535
        %p537 = scmp.lt.s32.totalorder %s26, 1
        %s538 = scalar_select %p537, %s26, 1
        %s539 = smul.addr %s538, 2
        %s540 = smul.addr %s539, 8
        %s541 = scalar_lea.vmem %s10, %s540
        %p542 = scmp.eq.s32.totalorder %s27, 0
        // Predicated region
        $region65: #{pipool_forward.1} parent=59 // pred_check
          %p543 = pneg %p542
        $region66: #{pipool_forward.1} parent=59 // pred_check_branch
          %545 = sbr.rel (%p543) target = $region68
        $region67: #{pipool_forward.1} parent=59 // pred_region
          %v546 = vld [vmem:[%s513] sm:$0xff]
          %v547 = vld [vmem:[%s513 + $0x8] sm:$0xff]
          %v548 = vld [vmem:[%s513 + $0x10] sm:$0xff]
          %v549 = vld [vmem:[%s513 + $0x18] sm:$0xff]
          %v550 = vld [vmem:[%s513 + $0x20] sm:$0xff]
          %v551 = vld [vmem:[%s513 + $0x28] sm:$0xff]
          %v552 = vld [vmem:[%s513 + $0x30] sm:$0xff]
          %v553 = vld [vmem:[%s7] sm:$0xff]
          %vm554 = vcmask 64512
          %v556 = vsel %vm554, %v546, 0
          %v559 = vsel %vm554, %v547, 0
          %v562 = vsel %vm554, %v548, 0
          %v565 = vsel %vm554, %v549, 0
          %v568 = vsel %vm554, %v550, 0
          %v571 = vsel %vm554, %v551, 0
          %v574 = vsel %vm554, %v552, 0
          %576 = vmatprep.subr.mxu0 0.0
          %577 = vmatpush1.msra.mxu0 %v553
          %578 = vmatprep.subr.mxu0 0.0
          %579 = vmatpush1.msra.mxu0 0.0
          %580 = vmatprep.subr.mxu0 0.0
          %581 = vmatpush1.msra.mxu0 0.0
          %582 = vmatprep.subr.mxu0 0.0
          %583 = vmatpush1.msra.mxu0 0.0
          %584 = vmatprep.subr.mxu0 0.0
          %585 = vmatpush1.msra.mxu0 0.0
          %586 = vmatprep.subr.mxu0 0.0
          %587 = vmatpush1.msra.mxu0 0.0
          %588 = vmatprep.subr.mxu0 0.0
          %589 = vmatpush1.msra.mxu0 0.0
          %590 = vmatprep.subr.mxu0 0.0
          %591 = vmatpush1.msra.mxu0 0.0
          %592 = vmatprep.subr.mxu0 0.0
          %593 = vmatpush1.msra.mxu0 0.0
          %594 = vmatprep.subr.mxu0 0.0
          %595 = vmatpush1.msra.mxu0 0.0
          %596 = vmatprep.subr.mxu0 0.0
          %597 = vmatpush1.msra.mxu0 0.0
          %598 = vmatprep.subr.mxu0 0.0
          %599 = vmatpush1.msra.mxu0 0.0
          %600 = vmatprep.subr.mxu0 0.0
          %601 = vmatpush1.msra.mxu0 0.0
          %602 = vmatprep.subr.mxu0 0.0
          %603 = vmatpush1.msra.mxu0 0.0
          %604 = vmatprep.subr.mxu0 0.0
          %605 = vmatpush1.msra.mxu0 0.0
          %606 = vmatprep.subr.mxu0 0.0
          %607 = vmatpush1.msra.mxu0 0.0
          %608 = vmatprep.subr.mxu0 0.0
          %609 = vmatpush1.msra.mxu0 0.0
          %610 = vmatprep.subr.mxu0 0.0
          %611 = vmatpush1.msra.mxu0 0.0
          %612 = vmatprep.subr.mxu0 0.0
          %613 = vmatpush1.msra.mxu0 0.0
          %614 = vmatprep.subr.mxu0 0.0
          %615 = vmatpush1.msra.mxu0 0.0
          %616 = vmatprep.subr.mxu0 0.0
          %617 = vmatpush1.msra.mxu0 0.0
          %618 = vmatprep.subr.mxu0 0.0
          %619 = vmatpush1.msra.mxu0 0.0
          %620 = vmatprep.subr.mxu0 0.0
          %621 = vmatpush1.msra.mxu0 0.0
          %622 = vmatprep.subr.mxu0 0.0
          %623 = vmatpush1.msra.mxu0 0.0
          %624 = vmatprep.subr.mxu0 0.0
          %625 = vmatpush1.msra.mxu0 0.0
          %626 = vmatprep.subr.mxu0 0.0
          %627 = vmatpush1.msra.mxu0 0.0
          %628 = vmatprep.subr.mxu0 0.0
          %629 = vmatpush1.msra.mxu0 0.0
          %630 = vmatprep.subr.mxu0 0.0
          %631 = vmatpush1.msra.mxu0 0.0
          %632 = vmatprep.subr.mxu0 0.0
          %633 = vmatpush1.msra.mxu0 0.0
          %634 = vmatprep.subr.mxu0 0.0
          %635 = vmatpush1.msra.mxu0 0.0
          %636 = vmatprep.subr.mxu0 0.0
          %637 = vmatpush1.msra.mxu0 0.0
          %638 = vmatprep.subr.mxu0 0.0
          %639 = vmatpush1.msra.mxu0 0.0
          %640 = vmatprep.mubr.f32.mxu0 0.0
          %641 = vmatmul.mubr.f32.gmra.mrb[0].mxu0 %v556
          %v642 = vpop.f32.mrb[0].mxu0
          %v643 = vadd.f32 0.0, %v642
          %v644 = vpop.f32.mrb[0].mxu0
          %645 = vmatprep.mubr.f32.mxu0 0.0
          %646 = vmatmul.mubr.f32.gmra.mrb[0].mxu0 %v559
          %v647 = vpop.f32.mrb[0].mxu0
          %v648 = vadd.f32 0.0, %v647
          %v649 = vpop.f32.mrb[0].mxu0
          %650 = vmatprep.mubr.f32.mxu0 0.0
          %651 = vmatmul.mubr.f32.gmra.mrb[0].mxu0 %v562
          %v652 = vpop.f32.mrb[0].mxu0
          %v653 = vadd.f32 0.0, %v652
          %v654 = vpop.f32.mrb[0].mxu0
          %655 = vmatprep.mubr.f32.mxu0 0.0
          %656 = vmatmul.mubr.f32.gmra.mrb[0].mxu0 %v565
          %v657 = vpop.f32.mrb[0].mxu0
          %v658 = vadd.f32 0.0, %v657
          %v659 = vpop.f32.mrb[0].mxu0
          %660 = vmatprep.mubr.f32.mxu0 0.0
          %661 = vmatmul.mubr.f32.gmra.mrb[0].mxu0 %v568
          %v662 = vpop.f32.mrb[0].mxu0
          %v663 = vadd.f32 0.0, %v662
          %v664 = vpop.f32.mrb[0].mxu0
          %665 = vmatprep.mubr.f32.mxu0 0.0
          %666 = vmatmul.mubr.f32.gmra.mrb[0].mxu0 %v571
          %v667 = vpop.f32.mrb[0].mxu0
          %v668 = vadd.f32 0.0, %v667
          %v669 = vpop.f32.mrb[0].mxu0
          %670 = vmatprep.mubr.f32.mxu0 0.0
          %671 = vmatmul.mubr.f32.gmra.mrb[0].mxu0 %v574
          %v672 = vpop.f32.mrb[0].mxu0
          %v673 = vadd.f32 0.0, %v672
          %v674 = vpop.f32.mrb[0].mxu0
          %675 = vdwg.mxu0
          %v676 = vld [vmem:[%s518] sm:$0xff]
          %v677 = vld [vmem:[%s518 + $0x8] sm:$0xff]
          %v678 = vld [vmem:[%s518 + $0x10] sm:$0xff]
          %v679 = vld [vmem:[%s518 + $0x18] sm:$0xff]
          %v680 = vld [vmem:[%s518 + $0x20] sm:$0xff]
          %v681 = vld [vmem:[%s518 + $0x28] sm:$0xff]
          %v682 = vld [vmem:[%s518 + $0x30] sm:$0xff]
          %v684 = vsel %vm554, %v676, 0
          %v687 = vsel %vm554, %v677, 0
          %v690 = vsel %vm554, %v678, 0
          %v693 = vsel %vm554, %v679, 0
          %v696 = vsel %vm554, %v680, 0
          %v699 = vsel %vm554, %v681, 0
          %v702 = vsel %vm554, %v682, 0
          %704 = vmatprep.subr.mxu0 0.0
          %705 = vmatpush1.msra.mxu0 %v553
          %706 = vmatprep.subr.mxu0 0.0
          %707 = vmatpush1.msra.mxu0 0.0
          %708 = vmatprep.subr.mxu0 0.0
          %709 = vmatpush1.msra.mxu0 0.0
          %710 = vmatprep.subr.mxu0 0.0
          %711 = vmatpush1.msra.mxu0 0.0
          %712 = vmatprep.subr.mxu0 0.0
          %713 = vmatpush1.msra.mxu0 0.0
          %714 = vmatprep.subr.mxu0 0.0
          %715 = vmatpush1.msra.mxu0 0.0
          %716 = vmatprep.subr.mxu0 0.0
          %717 = vmatpush1.msra.mxu0 0.0
          %718 = vmatprep.subr.mxu0 0.0
          %719 = vmatpush1.msra.mxu0 0.0
          %720 = vmatprep.subr.mxu0 0.0
          %721 = vmatpush1.msra.mxu0 0.0
          %722 = vmatprep.subr.mxu0 0.0
          %723 = vmatpush1.msra.mxu0 0.0
          %724 = vmatprep.subr.mxu0 0.0
          %725 = vmatpush1.msra.mxu0 0.0
          %726 = vmatprep.subr.mxu0 0.0
          %727 = vmatpush1.msra.mxu0 0.0
          %728 = vmatprep.subr.mxu0 0.0
          %729 = vmatpush1.msra.mxu0 0.0
          %730 = vmatprep.subr.mxu0 0.0
          %731 = vmatpush1.msra.mxu0 0.0
          %732 = vmatprep.subr.mxu0 0.0
          %733 = vmatpush1.msra.mxu0 0.0
          %734 = vmatprep.subr.mxu0 0.0
          %735 = vmatpush1.msra.mxu0 0.0
          %736 = vmatprep.subr.mxu0 0.0
          %737 = vmatpush1.msra.mxu0 0.0
          %738 = vmatprep.subr.mxu0 0.0
          %739 = vmatpush1.msra.mxu0 0.0
          %740 = vmatprep.subr.mxu0 0.0
          %741 = vmatpush1.msra.mxu0 0.0
          %742 = vmatprep.subr.mxu0 0.0
          %743 = vmatpush1.msra.mxu0 0.0
          %744 = vmatprep.subr.mxu0 0.0
          %745 = vmatpush1.msra.mxu0 0.0
          %746 = vmatprep.subr.mxu0 0.0
          %747 = vmatpush1.msra.mxu0 0.0
          %748 = vmatprep.subr.mxu0 0.0
          %749 = vmatpush1.msra.mxu0 0.0
          %750 = vmatprep.subr.mxu0 0.0
          %751 = vmatpush1.msra.mxu0 0.0
          %752 = vmatprep.subr.mxu0 0.0
          %753 = vmatpush1.msra.mxu0 0.0
          %754 = vmatprep.subr.mxu0 0.0
          %755 = vmatpush1.msra.mxu0 0.0
          %756 = vmatprep.subr.mxu0 0.0
          %757 = vmatpush1.msra.mxu0 0.0
          %758 = vmatprep.subr.mxu0 0.0
          %759 = vmatpush1.msra.mxu0 0.0
          %760 = vmatprep.subr.mxu0 0.0
          %761 = vmatpush1.msra.mxu0 0.0
          %762 = vmatprep.subr.mxu0 0.0
          %763 = vmatpush1.msra.mxu0 0.0
          %764 = vmatprep.subr.mxu0 0.0
          %765 = vmatpush1.msra.mxu0 0.0
          %766 = vmatprep.subr.mxu0 0.0
          %767 = vmatpush1.msra.mxu0 0.0
          %768 = vmatprep.mubr.f32.mxu0 0.0
          %769 = vmatmul.mubr.f32.gmra.mrb[0].mxu0 %v684
          %v770 = vpop.f32.mrb[0].mxu0
          %v771 = vadd.f32 0.0, %v770
          %v772 = vpop.f32.mrb[0].mxu0
          %773 = vmatprep.mubr.f32.mxu0 0.0
          %774 = vmatmul.mubr.f32.gmra.mrb[0].mxu0 %v687
          %v775 = vpop.f32.mrb[0].mxu0
          %v776 = vadd.f32 0.0, %v775
          %v777 = vpop.f32.mrb[0].mxu0
          %778 = vmatprep.mubr.f32.mxu0 0.0
          %779 = vmatmul.mubr.f32.gmra.mrb[0].mxu0 %v690
          %v780 = vpop.f32.mrb[0].mxu0
          %v781 = vadd.f32 0.0, %v780
          %v782 = vpop.f32.mrb[0].mxu0
          %783 = vmatprep.mubr.f32.mxu0 0.0
          %784 = vmatmul.mubr.f32.gmra.mrb[0].mxu0 %v693
          %v785 = vpop.f32.mrb[0].mxu0
          %v786 = vadd.f32 0.0, %v785
          %v787 = vpop.f32.mrb[0].mxu0
          %788 = vmatprep.mubr.f32.mxu0 0.0
          %789 = vmatmul.mubr.f32.gmra.mrb[0].mxu0 %v696
          %v790 = vpop.f32.mrb[0].mxu0
          %v791 = vadd.f32 0.0, %v790
          %v792 = vpop.f32.mrb[0].mxu0
          %793 = vmatprep.mubr.f32.mxu0 0.0
          %794 = vmatmul.mubr.f32.gmra.mrb[0].mxu0 %v699
          %v795 = vpop.f32.mrb[0].mxu0
          %v796 = vadd.f32 0.0, %v795
          %v797 = vpop.f32.mrb[0].mxu0
          %798 = vmatprep.mubr.f32.mxu0 0.0
          %799 = vmatmul.mubr.f32.gmra.mrb[0].mxu0 %v702
          %v800 = vpop.f32.mrb[0].mxu0
          %v801 = vadd.f32 0.0, %v800
          %v802 = vpop.f32.mrb[0].mxu0
          %803 = vdwg.mxu0
          %v804 = vld [vmem:[%s8] sm:$0xff]
          %v805 = vld [vmem:[%s8 + $0x8] sm:$0xff]
          %v806 = vld [vmem:[%s8 + $0x10] sm:$0xff]
          %v807 = vld [vmem:[%s8 + $0x18] sm:$0xff]
          %v808 = vld [vmem:[%s8 + $0x20] sm:$0xff]
          %v809 = vld [vmem:[%s8 + $0x28] sm:$0xff]
          %v810 = vld [vmem:[%s8 + $0x30] sm:$0xff]
          %812 = vset.pattern.permute.xlu0 0
          %813 = vperm.xlu0 %812, %v643
          %v814 = vpop.permute.xlu0 %813
          %817 = vset.pattern.permute.xlu0 0
          %818 = vperm.xlu0 %817, %v648
          %v819 = vpop.permute.xlu0 %818
          %822 = vset.pattern.permute.xlu0 0
          %823 = vperm.xlu0 %822, %v653
          %v824 = vpop.permute.xlu0 %823
          %827 = vset.pattern.permute.xlu0 0
          %828 = vperm.xlu0 %827, %v658
          %v829 = vpop.permute.xlu0 %828
          %832 = vset.pattern.permute.xlu0 0
          %833 = vperm.xlu0 %832, %v663
          %v834 = vpop.permute.xlu0 %833
          %837 = vset.pattern.permute.xlu0 0
          %838 = vperm.xlu0 %837, %v668
          %v839 = vpop.permute.xlu0 %838
          %842 = vset.pattern.permute.xlu0 0
          %843 = vperm.xlu0 %842, %v673
          %v844 = vpop.permute.xlu0 %843
          %v846 = vmul.f32 %v804, %v814
          %v847 = vmul.f32 %v805, %v819
          %v848 = vmul.f32 %v806, %v824
          %v849 = vmul.f32 %v807, %v829
          %v850 = vmul.f32 %v808, %v834
          %v851 = vmul.f32 %v809, %v839
          %v852 = vmul.f32 %v810, %v844
          %vm853 = vcmask 113664
          %854 = vst.msk [vmem:[#allocation2] sm:$0xff] %vm853, %v846
          %855 = vst.msk [vmem:[#allocation2 + $0x8] sm:$0xff] %vm853, %v847
          %856 = vst.msk [vmem:[#allocation2 + $0x10] sm:$0xff] %vm853, %v848
          %857 = vst.msk [vmem:[#allocation2 + $0x18] sm:$0xff] %vm853, %v849
          %858 = vst.msk [vmem:[#allocation2 + $0x20] sm:$0xff] %vm853, %v850
          %859 = vst.msk [vmem:[#allocation2 + $0x28] sm:$0xff] %vm853, %v851
          %860 = vst.msk [vmem:[#allocation2 + $0x30] sm:$0xff] %vm853, %v852
          %v861 = vld [vmem:[%s8] sm:$0xff]
          %v862 = vld [vmem:[%s8 + $0x8] sm:$0xff]
          %v863 = vld [vmem:[%s8 + $0x10] sm:$0xff]
          %v864 = vld [vmem:[%s8 + $0x18] sm:$0xff]
          %v865 = vld [vmem:[%s8 + $0x20] sm:$0xff]
          %v866 = vld [vmem:[%s8 + $0x28] sm:$0xff]
          %v867 = vld [vmem:[%s8 + $0x30] sm:$0xff]
          %869 = vset.pattern.permute.xlu0 0
          %870 = vperm.xlu0 %869, %v771
          %v871 = vpop.permute.xlu0 %870
          %874 = vset.pattern.permute.xlu0 0
          %875 = vperm.xlu0 %874, %v776
          %v876 = vpop.permute.xlu0 %875
          %879 = vset.pattern.permute.xlu0 0
          %880 = vperm.xlu0 %879, %v781
          %v881 = vpop.permute.xlu0 %880
          %884 = vset.pattern.permute.xlu0 0
          %885 = vperm.xlu0 %884, %v786
          %v886 = vpop.permute.xlu0 %885
          %889 = vset.pattern.permute.xlu0 0
          %890 = vperm.xlu0 %889, %v791
          %v891 = vpop.permute.xlu0 %890
          %894 = vset.pattern.permute.xlu0 0
          %895 = vperm.xlu0 %894, %v796
          %v896 = vpop.permute.xlu0 %895
          %899 = vset.pattern.permute.xlu0 0
          %900 = vperm.xlu0 %899, %v801
          %v901 = vpop.permute.xlu0 %900
          %v903 = vmul.f32 %v861, %v871
          %v904 = vmul.f32 %v862, %v876
          %v905 = vmul.f32 %v863, %v881
          %v906 = vmul.f32 %v864, %v886
          %v907 = vmul.f32 %v865, %v891
          %v908 = vmul.f32 %v866, %v896
          %v909 = vmul.f32 %v867, %v901
          %910 = vst.msk [vmem:[#allocation3] sm:$0xff] %vm853, %v903
          %911 = vst.msk [vmem:[#allocation3 + $0x8] sm:$0xff] %vm853, %v904
          %912 = vst.msk [vmem:[#allocation3 + $0x10] sm:$0xff] %vm853, %v905
          %913 = vst.msk [vmem:[#allocation3 + $0x18] sm:$0xff] %vm853, %v906
          %914 = vst.msk [vmem:[#allocation3 + $0x20] sm:$0xff] %vm853, %v907
          %915 = vst.msk [vmem:[#allocation3 + $0x28] sm:$0xff] %vm853, %v908
          %916 = vst.msk [vmem:[#allocation3 + $0x30] sm:$0xff] %vm853, %v909
          %917 = vst.msk [vmem:[#allocation4] sm:$0xff] %vm853, 0.0
          %vm918 = vcmask 111616
          %919 = vst.msk [vmem:[#allocation4 + $0x8] sm:$0x3f] %vm918, 0.0
        $region68: #{pipool_forward.1} parent=59 // pred_fallthru
          _
        %s920 = sld [smem:[#allocation5]]
        %v921 = vld [vmem:[%s8] sm:$0xff]
        %v922 = vld [vmem:[%s8 + $0x8] sm:$0xff]
        %v923 = vld [vmem:[%s8 + $0x10] sm:$0xff]
        %v924 = vld [vmem:[%s8 + $0x18] sm:$0xff]
        %v925 = vld [vmem:[%s8 + $0x20] sm:$0xff]
        %v926 = vld [vmem:[%s8 + $0x28] sm:$0xff]
        %v927 = vld [vmem:[%s8 + $0x30] sm:$0xff]
        %v928 = vld [vmem:[%s527] sm:$0x3]
        %v929 = vld [vmem:[%s527 + $0x2] sm:$0x3]
        %v930 = vunpack.c.0.s8 %v928
        %v931 = vunpack.c.0.s8 %v929
        %v932 = vcvt.s32.f32 %v930
        %v933 = vcvt.s32.f32 %v931
        %v934 = vld [vmem:[%s536] sm:$0x3]
        %v935 = vld [vmem:[%s536 + $0x2] sm:$0x3]
        %v936 = vunpack.c.0.s8 %v934
        %v937 = vunpack.c.0.s8 %v935
        %v938 = vcvt.s32.f32 %v936
        %v939 = vcvt.s32.f32 %v937
        %v940 = vld [vmem:[%s499] sm:$0xff]
        %v941 = vld [vmem:[%s499 + $0x8] sm:$0x3f]
        %v942 = vld [vmem:[%s6] sm:$0xff]
        %v943 = vstv %s920
        %vm944 = vcmask 64512
        %v946 = vsel %vm944, %v940, 0
        %v949 = vsel %vm944, %v941, 0
        %951 = vmatprep.subr.mxu0 0.0
        %952 = vmatpush1.msra.mxu0 %v942
        %953 = vmatprep.subr.mxu0 0.0
        %954 = vmatpush1.msra.mxu0 0.0
        %955 = vmatprep.subr.mxu0 0.0
        %956 = vmatpush1.msra.mxu0 0.0
        %957 = vmatprep.subr.mxu0 0.0
        %958 = vmatpush1.msra.mxu0 0.0
        %959 = vmatprep.subr.mxu0 0.0
        %960 = vmatpush1.msra.mxu0 0.0
        %961 = vmatprep.subr.mxu0 0.0
        %962 = vmatpush1.msra.mxu0 0.0
        %963 = vmatprep.subr.mxu0 0.0
        %964 = vmatpush1.msra.mxu0 0.0
        %965 = vmatprep.subr.mxu0 0.0
        %966 = vmatpush1.msra.mxu0 0.0
        %967 = vmatprep.subr.mxu0 0.0
        %968 = vmatpush1.msra.mxu0 0.0
        %969 = vmatprep.subr.mxu0 0.0
        %970 = vmatpush1.msra.mxu0 0.0
        %971 = vmatprep.subr.mxu0 0.0
        %972 = vmatpush1.msra.mxu0 0.0
        %973 = vmatprep.subr.mxu0 0.0
        %974 = vmatpush1.msra.mxu0 0.0
        %975 = vmatprep.subr.mxu0 0.0
        %976 = vmatpush1.msra.mxu0 0.0
        %977 = vmatprep.subr.mxu0 0.0
        %978 = vmatpush1.msra.mxu0 0.0
        %979 = vmatprep.subr.mxu0 0.0
        %980 = vmatpush1.msra.mxu0 0.0
        %981 = vmatprep.subr.mxu0 0.0
        %982 = vmatpush1.msra.mxu0 0.0
        %983 = vmatprep.subr.mxu0 0.0
        %984 = vmatpush1.msra.mxu0 0.0
        %985 = vmatprep.subr.mxu0 0.0
        %986 = vmatpush1.msra.mxu0 0.0
        %987 = vmatprep.subr.mxu0 0.0
        %988 = vmatpush1.msra.mxu0 0.0
        %989 = vmatprep.subr.mxu0 0.0
        %990 = vmatpush1.msra.mxu0 0.0
        %991 = vmatprep.subr.mxu0 0.0
        %992 = vmatpush1.msra.mxu0 0.0
        %993 = vmatprep.subr.mxu0 0.0
        %994 = vmatpush1.msra.mxu0 0.0
        %995 = vmatprep.subr.mxu0 0.0
        %996 = vmatpush1.msra.mxu0 0.0
        %997 = vmatprep.subr.mxu0 0.0
        %998 = vmatpush1.msra.mxu0 0.0
        %999 = vmatprep.subr.mxu0 0.0
        %1000 = vmatpush1.msra.mxu0 0.0
        %1001 = vmatprep.subr.mxu0 0.0
        %1002 = vmatpush1.msra.mxu0 0.0
        %1003 = vmatprep.subr.mxu0 0.0
        %1004 = vmatpush1.msra.mxu0 0.0
        %1005 = vmatprep.subr.mxu0 0.0
        %1006 = vmatpush1.msra.mxu0 0.0
        %1007 = vmatprep.subr.mxu0 0.0
        %1008 = vmatpush1.msra.mxu0 0.0
        %1009 = vmatprep.subr.mxu0 0.0
        %1010 = vmatpush1.msra.mxu0 0.0
        %1011 = vmatprep.subr.mxu0 0.0
        %1012 = vmatpush1.msra.mxu0 0.0
        %1013 = vmatprep.subr.mxu0 0.0
        %1014 = vmatpush1.msra.mxu0 0.0
        %1015 = vmatprep.mubr.f32.mxu0 0.0
        %1016 = vmatmul.mubr.f32.gmra.mrb[0].mxu0 %v946
        %v1017 = vpop.f32.mrb[0].mxu0
        %v1018 = vadd.f32 %v943, %v1017
        %v1019 = vpop.f32.mrb[0].mxu0
        %1020 = vmatprep.mubr.f32.mxu0 0.0
        %1021 = vmatmul.mubr.f32.gmra.mrb[0].mxu0 %v949
        %v1022 = vpop.f32.mrb[0].mxu0
        %v1023 = vadd.f32 %v943, %v1022
        %v1024 = vpop.f32.mrb[0].mxu0
        %1025 = vdwg.mxu0
        %v1026 = vld [vmem:[%s508] sm:$0xff]
        %v1027 = vld [vmem:[%s508 + $0x8] sm:$0x3f]
        %v1029 = vsel %vm944, %v1026, 0
        %v1032 = vsel %vm944, %v1027, 0
        %1034 = vmatprep.subr.mxu0 0.0
        %1035 = vmatpush1.msra.mxu0 %v942
        %1036 = vmatprep.subr.mxu0 0.0
        %1037 = vmatpush1.msra.mxu0 0.0
        %1038 = vmatprep.subr.mxu0 0.0
        %1039 = vmatpush1.msra.mxu0 0.0
        %1040 = vmatprep.subr.mxu0 0.0
        %1041 = vmatpush1.msra.mxu0 0.0
        %1042 = vmatprep.subr.mxu0 0.0
        %1043 = vmatpush1.msra.mxu0 0.0
        %1044 = vmatprep.subr.mxu0 0.0
        %1045 = vmatpush1.msra.mxu0 0.0
        %1046 = vmatprep.subr.mxu0 0.0
        %1047 = vmatpush1.msra.mxu0 0.0
        %1048 = vmatprep.subr.mxu0 0.0
        %1049 = vmatpush1.msra.mxu0 0.0
        %1050 = vmatprep.subr.mxu0 0.0
        %1051 = vmatpush1.msra.mxu0 0.0
        %1052 = vmatprep.subr.mxu0 0.0
        %1053 = vmatpush1.msra.mxu0 0.0
        %1054 = vmatprep.subr.mxu0 0.0
        %1055 = vmatpush1.msra.mxu0 0.0
        %1056 = vmatprep.subr.mxu0 0.0
        %1057 = vmatpush1.msra.mxu0 0.0
        %1058 = vmatprep.subr.mxu0 0.0
        %1059 = vmatpush1.msra.mxu0 0.0
        %1060 = vmatprep.subr.mxu0 0.0
        %1061 = vmatpush1.msra.mxu0 0.0
        %1062 = vmatprep.subr.mxu0 0.0
        %1063 = vmatpush1.msra.mxu0 0.0
        %1064 = vmatprep.subr.mxu0 0.0
        %1065 = vmatpush1.msra.mxu0 0.0
        %1066 = vmatprep.subr.mxu0 0.0
        %1067 = vmatpush1.msra.mxu0 0.0
        %1068 = vmatprep.subr.mxu0 0.0
        %1069 = vmatpush1.msra.mxu0 0.0
        %1070 = vmatprep.subr.mxu0 0.0
        %1071 = vmatpush1.msra.mxu0 0.0
        %1072 = vmatprep.subr.mxu0 0.0
        %1073 = vmatpush1.msra.mxu0 0.0
        %1074 = vmatprep.subr.mxu0 0.0
        %1075 = vmatpush1.msra.mxu0 0.0
        %1076 = vmatprep.subr.mxu0 0.0
        %1077 = vmatpush1.msra.mxu0 0.0
        %1078 = vmatprep.subr.mxu0 0.0
        %1079 = vmatpush1.msra.mxu0 0.0
        %1080 = vmatprep.subr.mxu0 0.0
        %1081 = vmatpush1.msra.mxu0 0.0
        %1082 = vmatprep.subr.mxu0 0.0
        %1083 = vmatpush1.msra.mxu0 0.0
        %1084 = vmatprep.subr.mxu0 0.0
        %1085 = vmatpush1.msra.mxu0 0.0
        %1086 = vmatprep.subr.mxu0 0.0
        %1087 = vmatpush1.msra.mxu0 0.0
        %1088 = vmatprep.subr.mxu0 0.0
        %1089 = vmatpush1.msra.mxu0 0.0
        %1090 = vmatprep.subr.mxu0 0.0
        %1091 = vmatpush1.msra.mxu0 0.0
        %1092 = vmatprep.subr.mxu0 0.0
        %1093 = vmatpush1.msra.mxu0 0.0
        %1094 = vmatprep.subr.mxu0 0.0
        %1095 = vmatpush1.msra.mxu0 0.0
        %1096 = vmatprep.subr.mxu0 0.0
        %1097 = vmatpush1.msra.mxu0 0.0
        %1098 = vmatprep.mubr.f32.mxu0 0.0
        %1099 = vmatmul.mubr.f32.gmra.mrb[0].mxu0 %v1029
        %v1100 = vpop.f32.mrb[0].mxu0
        %v1101 = vadd.f32 %v943, %v1100
        %v1102 = vpop.f32.mrb[0].mxu0
        %1103 = vmatprep.mubr.f32.mxu0 0.0
        %1104 = vmatmul.mubr.f32.gmra.mrb[0].mxu0 %v1032
        %v1105 = vpop.f32.mrb[0].mxu0
        %v1106 = vadd.f32 %v943, %v1105
        %v1107 = vpop.f32.mrb[0].mxu0
        %1108 = vdwg.mxu0
        %vm1109 = vcmask 457728
        %v1111 = vsel %vm1109, %v932, 0
        %v1114 = vsel %vm1109, %v933, 0
        %1116 = vmatprep.subr.mxu0 0.0
        %1117 = vmatpush1.msra.mxu0 %v921
        %1118 = vmatprep.subr.mxu0 0.0
        %1119 = vmatpush1.msra.mxu0 %v922
        %1120 = vmatprep.subr.mxu0 0.0
        %1121 = vmatpush1.msra.mxu0 %v923
        %1122 = vmatprep.subr.mxu0 0.0
        %1123 = vmatpush1.msra.mxu0 %v924
        %1124 = vmatprep.subr.mxu0 0.0
        %1125 = vmatpush1.msra.mxu0 %v925
        %1126 = vmatprep.subr.mxu0 0.0
        %1127 = vmatpush1.msra.mxu0 %v926
        %1128 = vmatprep.subr.mxu0 0.0
        %1129 = vmatpush1.msra.mxu0 %v927
        %1130 = vmatprep.subr.mxu0 0.0
        %1131 = vmatpush1.msra.mxu0 0.0
        %1132 = vmatprep.subr.mxu0 0.0
        %1133 = vmatpush1.msra.mxu0 0.0
        %1134 = vmatprep.subr.mxu0 0.0
        %1135 = vmatpush1.msra.mxu0 0.0
        %1136 = vmatprep.subr.mxu0 0.0
        %1137 = vmatpush1.msra.mxu0 0.0
        %1138 = vmatprep.subr.mxu0 0.0
        %1139 = vmatpush1.msra.mxu0 0.0
        %1140 = vmatprep.subr.mxu0 0.0
        %1141 = vmatpush1.msra.mxu0 0.0
        %1142 = vmatprep.subr.mxu0 0.0
        %1143 = vmatpush1.msra.mxu0 0.0
        %1144 = vmatprep.subr.mxu0 0.0
        %1145 = vmatpush1.msra.mxu0 0.0
        %1146 = vmatprep.subr.mxu0 0.0
        %1147 = vmatpush1.msra.mxu0 0.0
        %1148 = vmatprep.subr.mxu0 0.0
        %1149 = vmatpush1.msra.mxu0 0.0
        %1150 = vmatprep.subr.mxu0 0.0
        %1151 = vmatpush1.msra.mxu0 0.0
        %1152 = vmatprep.subr.mxu0 0.0
        %1153 = vmatpush1.msra.mxu0 0.0
        %1154 = vmatprep.subr.mxu0 0.0
        %1155 = vmatpush1.msra.mxu0 0.0
        %1156 = vmatprep.subr.mxu0 0.0
        %1157 = vmatpush1.msra.mxu0 0.0
        %1158 = vmatprep.subr.mxu0 0.0
        %1159 = vmatpush1.msra.mxu0 0.0
        %1160 = vmatprep.subr.mxu0 0.0
        %1161 = vmatpush1.msra.mxu0 0.0
        %1162 = vmatprep.subr.mxu0 0.0
        %1163 = vmatpush1.msra.mxu0 0.0
        %1164 = vmatprep.subr.mxu0 0.0
        %1165 = vmatpush1.msra.mxu0 0.0
        %1166 = vmatprep.subr.mxu0 0.0
        %1167 = vmatpush1.msra.mxu0 0.0
        %1168 = vmatprep.subr.mxu0 0.0
        %1169 = vmatpush1.msra.mxu0 0.0
        %1170 = vmatprep.subr.mxu0 0.0
        %1171 = vmatpush1.msra.mxu0 0.0
        %1172 = vmatprep.subr.mxu0 0.0
        %1173 = vmatpush1.msra.mxu0 0.0
        %1174 = vmatprep.subr.mxu0 0.0
        %1175 = vmatpush1.msra.mxu0 0.0
        %1176 = vmatprep.subr.mxu0 0.0
        %1177 = vmatpush1.msra.mxu0 0.0
        %1178 = vmatprep.subr.mxu0 0.0
        %1179 = vmatpush1.msra.mxu0 0.0
        %1180 = vmatprep.mubr.f32.mxu0 0.0
        %1181 = vmatmul.mubr.f32.gmra.mrb[0].mxu0 %v1111
        %v1182 = vpop.f32.mrb[0].mxu0
        %v1183 = vadd.f32 0.0, %v1182
        %v1184 = vpop.f32.mrb[0].mxu0
        %1185 = vmatprep.mubr.f32.mxu0 0.0
        %1186 = vmatmul.mubr.f32.gmra.mrb[0].mxu0 %v1114
        %v1187 = vpop.f32.mrb[0].mxu0
        %v1188 = vadd.f32 0.0, %v1187
        %v1189 = vpop.f32.mrb[0].mxu0
        %1190 = vdwg.mxu0
        %1192 = vset.pattern.permute.xlu0 0
        %1193 = vperm.xlu0 %1192, %v1018
        %v1194 = vpop.permute.xlu0 %1193
        %1197 = vset.pattern.permute.xlu0 0
        %1198 = vperm.xlu0 %1197, %v1023
        %v1199 = vpop.permute.xlu0 %1198
        %v1201 = vmul.f32 %v1194, %v1183
        %v1202 = vmul.f32 %v1199, %v1188
        %v1203 = vld [vmem:[#allocation2] sm:$0xff]
        %v1204 = vld [vmem:[#allocation2 + $0x8] sm:$0xff]
        %v1205 = vld [vmem:[#allocation2 + $0x10] sm:$0xff]
        %v1206 = vld [vmem:[#allocation2 + $0x18] sm:$0xff]
        %v1207 = vld [vmem:[#allocation2 + $0x20] sm:$0xff]
        %v1208 = vld [vmem:[#allocation2 + $0x28] sm:$0xff]
        %v1209 = vld [vmem:[#allocation2 + $0x30] sm:$0xff]
        %1210 = vmatprep.subr.mxu0 0.0
        %1211 = vmatpush1.msra.mxu0 %v1203
        %1212 = vmatprep.subr.mxu0 0.0
        %1213 = vmatpush1.msra.mxu0 %v1204
        %1214 = vmatprep.subr.mxu0 0.0
        %1215 = vmatpush1.msra.mxu0 %v1205
        %1216 = vmatprep.subr.mxu0 0.0
        %1217 = vmatpush1.msra.mxu0 %v1206
        %1218 = vmatprep.subr.mxu0 0.0
        %1219 = vmatpush1.msra.mxu0 %v1207
        %1220 = vmatprep.subr.mxu0 0.0
        %1221 = vmatpush1.msra.mxu0 %v1208
        %1222 = vmatprep.subr.mxu0 0.0
        %1223 = vmatpush1.msra.mxu0 %v1209
        %1224 = vmatprep.subr.mxu0 0.0
        %1225 = vmatpush1.msra.mxu0 0.0
        %1226 = vmatprep.subr.mxu0 0.0
        %1227 = vmatpush1.msra.mxu0 0.0
        %1228 = vmatprep.subr.mxu0 0.0
        %1229 = vmatpush1.msra.mxu0 0.0
        %1230 = vmatprep.subr.mxu0 0.0
        %1231 = vmatpush1.msra.mxu0 0.0
        %1232 = vmatprep.subr.mxu0 0.0
        %1233 = vmatpush1.msra.mxu0 0.0
        %1234 = vmatprep.subr.mxu0 0.0
        %1235 = vmatpush1.msra.mxu0 0.0
        %1236 = vmatprep.subr.mxu0 0.0
        %1237 = vmatpush1.msra.mxu0 0.0
        %1238 = vmatprep.subr.mxu0 0.0
        %1239 = vmatpush1.msra.mxu0 0.0
        %1240 = vmatprep.subr.mxu0 0.0
        %1241 = vmatpush1.msra.mxu0 0.0
        %1242 = vmatprep.subr.mxu0 0.0
        %1243 = vmatpush1.msra.mxu0 0.0
        %1244 = vmatprep.subr.mxu0 0.0
        %1245 = vmatpush1.msra.mxu0 0.0
        %1246 = vmatprep.subr.mxu0 0.0
        %1247 = vmatpush1.msra.mxu0 0.0
        %1248 = vmatprep.subr.mxu0 0.0
        %1249 = vmatpush1.msra.mxu0 0.0
        %1250 = vmatprep.subr.mxu0 0.0
        %1251 = vmatpush1.msra.mxu0 0.0
        %1252 = vmatprep.subr.mxu0 0.0
        %1253 = vmatpush1.msra.mxu0 0.0
        %1254 = vmatprep.subr.mxu0 0.0
        %1255 = vmatpush1.msra.mxu0 0.0
        %1256 = vmatprep.subr.mxu0 0.0
        %1257 = vmatpush1.msra.mxu0 0.0
        %1258 = vmatprep.subr.mxu0 0.0
        %1259 = vmatpush1.msra.mxu0 0.0
        %1260 = vmatprep.subr.mxu0 0.0
        %1261 = vmatpush1.msra.mxu0 0.0
        %1262 = vmatprep.subr.mxu0 0.0
        %1263 = vmatpush1.msra.mxu0 0.0
        %1264 = vmatprep.subr.mxu0 0.0
        %1265 = vmatpush1.msra.mxu0 0.0
        %1266 = vmatprep.subr.mxu0 0.0
        %1267 = vmatpush1.msra.mxu0 0.0
        %1268 = vmatprep.subr.mxu0 0.0
        %1269 = vmatpush1.msra.mxu0 0.0
        %1270 = vmatprep.subr.mxu0 0.0
        %1271 = vmatpush1.msra.mxu0 0.0
        %1272 = vmatprep.subr.mxu0 0.0
        %1273 = vmatpush1.msra.mxu0 0.0
        %1274 = vmatprep.mubr.f32.mxu0 0.0
        %1275 = vmatmul.mubr.f32.gmra.mrb[0].mxu0 %v1111
        %v1276 = vpop.f32.mrb[0].mxu0
        %v1277 = vadd.f32 0.0, %v1276
        %v1278 = vpop.f32.mrb[0].mxu0
        %1279 = vmatprep.mubr.f32.mxu0 0.0
        %1280 = vmatmul.mubr.f32.gmra.mrb[0].mxu0 %v1114
        %v1281 = vpop.f32.mrb[0].mxu0
        %v1282 = vadd.f32 0.0, %v1281
        %v1283 = vpop.f32.mrb[0].mxu0
        %1284 = vdwg.mxu0
        %v1285 = vadd.f32 %v1201, %v1277
        %v1286 = vadd.f32 %v1202, %v1282
        %v1288 = vsel %vm1109, %v938, 0
        %v1291 = vsel %vm1109, %v939, 0
        %1293 = vmatprep.subr.mxu0 0.0
        %1294 = vmatpush1.msra.mxu0 %v921
        %1295 = vmatprep.subr.mxu0 0.0
        %1296 = vmatpush1.msra.mxu0 %v922
        %1297 = vmatprep.subr.mxu0 0.0
        %1298 = vmatpush1.msra.mxu0 %v923
        %1299 = vmatprep.subr.mxu0 0.0
        %1300 = vmatpush1.msra.mxu0 %v924
        %1301 = vmatprep.subr.mxu0 0.0
        %1302 = vmatpush1.msra.mxu0 %v925
        %1303 = vmatprep.subr.mxu0 0.0
        %1304 = vmatpush1.msra.mxu0 %v926
        %1305 = vmatprep.subr.mxu0 0.0
        %1306 = vmatpush1.msra.mxu0 %v927
        %1307 = vmatprep.subr.mxu0 0.0
        %1308 = vmatpush1.msra.mxu0 0.0
        %1309 = vmatprep.subr.mxu0 0.0
        %1310 = vmatpush1.msra.mxu0 0.0
        %1311 = vmatprep.subr.mxu0 0.0
        %1312 = vmatpush1.msra.mxu0 0.0
        %1313 = vmatprep.subr.mxu0 0.0
        %1314 = vmatpush1.msra.mxu0 0.0
        %1315 = vmatprep.subr.mxu0 0.0
        %1316 = vmatpush1.msra.mxu0 0.0
        %1317 = vmatprep.subr.mxu0 0.0
        %1318 = vmatpush1.msra.mxu0 0.0
        %1319 = vmatprep.subr.mxu0 0.0
        %1320 = vmatpush1.msra.mxu0 0.0
        %1321 = vmatprep.subr.mxu0 0.0
        %1322 = vmatpush1.msra.mxu0 0.0
        %1323 = vmatprep.subr.mxu0 0.0
        %1324 = vmatpush1.msra.mxu0 0.0
        %1325 = vmatprep.subr.mxu0 0.0
        %1326 = vmatpush1.msra.mxu0 0.0
        %1327 = vmatprep.subr.mxu0 0.0
        %1328 = vmatpush1.msra.mxu0 0.0
        %1329 = vmatprep.subr.mxu0 0.0
        %1330 = vmatpush1.msra.mxu0 0.0
        %1331 = vmatprep.subr.mxu0 0.0
        %1332 = vmatpush1.msra.mxu0 0.0
        %1333 = vmatprep.subr.mxu0 0.0
        %1334 = vmatpush1.msra.mxu0 0.0
        %1335 = vmatprep.subr.mxu0 0.0
        %1336 = vmatpush1.msra.mxu0 0.0
        %1337 = vmatprep.subr.mxu0 0.0
        %1338 = vmatpush1.msra.mxu0 0.0
        %1339 = vmatprep.subr.mxu0 0.0
        %1340 = vmatpush1.msra.mxu0 0.0
        %1341 = vmatprep.subr.mxu0 0.0
        %1342 = vmatpush1.msra.mxu0 0.0
        %1343 = vmatprep.subr.mxu0 0.0
        %1344 = vmatpush1.msra.mxu0 0.0
        %1345 = vmatprep.subr.mxu0 0.0
        %1346 = vmatpush1.msra.mxu0 0.0
        %1347 = vmatprep.subr.mxu0 0.0
        %1348 = vmatpush1.msra.mxu0 0.0
        %1349 = vmatprep.subr.mxu0 0.0
        %1350 = vmatpush1.msra.mxu0 0.0
        %1351 = vmatprep.subr.mxu0 0.0
        %1352 = vmatpush1.msra.mxu0 0.0
        %1353 = vmatprep.subr.mxu0 0.0
        %1354 = vmatpush1.msra.mxu0 0.0
        %1355 = vmatprep.subr.mxu0 0.0
        %1356 = vmatpush1.msra.mxu0 0.0
        %1357 = vmatprep.mubr.f32.mxu0 0.0
        %1358 = vmatmul.mubr.f32.gmra.mrb[0].mxu0 %v1288
        %v1359 = vpop.f32.mrb[0].mxu0
        %v1360 = vadd.f32 0.0, %v1359
        %v1361 = vpop.f32.mrb[0].mxu0
        %1362 = vmatprep.mubr.f32.mxu0 0.0
        %1363 = vmatmul.mubr.f32.gmra.mrb[0].mxu0 %v1291
        %v1364 = vpop.f32.mrb[0].mxu0
        %v1365 = vadd.f32 0.0, %v1364
        %v1366 = vpop.f32.mrb[0].mxu0
        %1367 = vdwg.mxu0
        %1369 = vset.pattern.permute.xlu0 0
        %1370 = vperm.xlu0 %1369, %v1101
        %v1371 = vpop.permute.xlu0 %1370
        %1374 = vset.pattern.permute.xlu0 0
        %1375 = vperm.xlu0 %1374, %v1106
        %v1376 = vpop.permute.xlu0 %1375
        %v1378 = vmul.f32 %v1371, %v1360
        %v1379 = vmul.f32 %v1376, %v1365
        %v1380 = vld [vmem:[#allocation3] sm:$0xff]
        %v1381 = vld [vmem:[#allocation3 + $0x8] sm:$0xff]
        %v1382 = vld [vmem:[#allocation3 + $0x10] sm:$0xff]
        %v1383 = vld [vmem:[#allocation3 + $0x18] sm:$0xff]
        %v1384 = vld [vmem:[#allocation3 + $0x20] sm:$0xff]
        %v1385 = vld [vmem:[#allocation3 + $0x28] sm:$0xff]
        %v1386 = vld [vmem:[#allocation3 + $0x30] sm:$0xff]
        %1387 = vmatprep.subr.mxu0 0.0
        %1388 = vmatpush1.msra.mxu0 %v1380
        %1389 = vmatprep.subr.mxu0 0.0
        %1390 = vmatpush1.msra.mxu0 %v1381
        %1391 = vmatprep.subr.mxu0 0.0
        %1392 = vmatpush1.msra.mxu0 %v1382
        %1393 = vmatprep.subr.mxu0 0.0
        %1394 = vmatpush1.msra.mxu0 %v1383
        %1395 = vmatprep.subr.mxu0 0.0
        %1396 = vmatpush1.msra.mxu0 %v1384
        %1397 = vmatprep.subr.mxu0 0.0
        %1398 = vmatpush1.msra.mxu0 %v1385
        %1399 = vmatprep.subr.mxu0 0.0
        %1400 = vmatpush1.msra.mxu0 %v1386
        %1401 = vmatprep.subr.mxu0 0.0
        %1402 = vmatpush1.msra.mxu0 0.0
        %1403 = vmatprep.subr.mxu0 0.0
        %1404 = vmatpush1.msra.mxu0 0.0
        %1405 = vmatprep.subr.mxu0 0.0
        %1406 = vmatpush1.msra.mxu0 0.0
        %1407 = vmatprep.subr.mxu0 0.0
        %1408 = vmatpush1.msra.mxu0 0.0
        %1409 = vmatprep.subr.mxu0 0.0
        %1410 = vmatpush1.msra.mxu0 0.0
        %1411 = vmatprep.subr.mxu0 0.0
        %1412 = vmatpush1.msra.mxu0 0.0
        %1413 = vmatprep.subr.mxu0 0.0
        %1414 = vmatpush1.msra.mxu0 0.0
        %1415 = vmatprep.subr.mxu0 0.0
        %1416 = vmatpush1.msra.mxu0 0.0
        %1417 = vmatprep.subr.mxu0 0.0
        %1418 = vmatpush1.msra.mxu0 0.0
        %1419 = vmatprep.subr.mxu0 0.0
        %1420 = vmatpush1.msra.mxu0 0.0
        %1421 = vmatprep.subr.mxu0 0.0
        %1422 = vmatpush1.msra.mxu0 0.0
        %1423 = vmatprep.subr.mxu0 0.0
        %1424 = vmatpush1.msra.mxu0 0.0
        %1425 = vmatprep.subr.mxu0 0.0
        %1426 = vmatpush1.msra.mxu0 0.0
        %1427 = vmatprep.subr.mxu0 0.0
        %1428 = vmatpush1.msra.mxu0 0.0
        %1429 = vmatprep.subr.mxu0 0.0
        %1430 = vmatpush1.msra.mxu0 0.0
        %1431 = vmatprep.subr.mxu0 0.0
        %1432 = vmatpush1.msra.mxu0 0.0
        %1433 = vmatprep.subr.mxu0 0.0
        %1434 = vmatpush1.msra.mxu0 0.0
        %1435 = vmatprep.subr.mxu0 0.0
        %1436 = vmatpush1.msra.mxu0 0.0
        %1437 = vmatprep.subr.mxu0 0.0
        %1438 = vmatpush1.msra.mxu0 0.0
        %1439 = vmatprep.subr.mxu0 0.0
        %1440 = vmatpush1.msra.mxu0 0.0
        %1441 = vmatprep.subr.mxu0 0.0
        %1442 = vmatpush1.msra.mxu0 0.0
        %1443 = vmatprep.subr.mxu0 0.0
        %1444 = vmatpush1.msra.mxu0 0.0
        %1445 = vmatprep.subr.mxu0 0.0
        %1446 = vmatpush1.msra.mxu0 0.0
        %1447 = vmatprep.subr.mxu0 0.0
        %1448 = vmatpush1.msra.mxu0 0.0
        %1449 = vmatprep.subr.mxu0 0.0
        %1450 = vmatpush1.msra.mxu0 0.0
        %1451 = vmatprep.mubr.f32.mxu0 0.0
        %1452 = vmatmul.mubr.f32.gmra.mrb[0].mxu0 %v1288
        %v1453 = vpop.f32.mrb[0].mxu0
        %v1454 = vadd.f32 0.0, %v1453
        %v1455 = vpop.f32.mrb[0].mxu0
        %1456 = vmatprep.mubr.f32.mxu0 0.0
        %1457 = vmatmul.mubr.f32.gmra.mrb[0].mxu0 %v1291
        %v1458 = vpop.f32.mrb[0].mxu0
        %v1459 = vadd.f32 0.0, %v1458
        %v1460 = vpop.f32.mrb[0].mxu0
        %1461 = vdwg.mxu0
        %v1462 = vadd.f32 %v1378, %v1454
        %v1463 = vadd.f32 %v1379, %v1459
        %v1464 = vld [vmem:[#allocation4] sm:$0xff]
        %v1465 = vld [vmem:[#allocation4 + $0x8] sm:$0x3f]
        %v1466 = vsub.f32 %v1462, %v1285
        %v1467 = vsub.f32 %v1463, %v1286
        %v1468 = vadd.f32 %v1464, %v1466
        %v1469 = vadd.f32 %v1465, %v1467
        %vm1470 = vcmask 113664
        %1471 = vst.msk [vmem:[#allocation4] sm:$0xff] %vm1470, %v1468
        %vm1472 = vcmask 111616
        %1473 = vst.msk [vmem:[#allocation4 + $0x8] sm:$0x3f] %vm1472, %v1469
        %p1474 = scmp.eq.s32.totalorder %s27, 3
        // Predicated region
        $region69: #{pipool_forward.1} parent=59 // pred_check
          %p1475 = pneg %p1474
        $region70: #{pipool_forward.1} parent=59 // pred_check_branch
          %1477 = sbr.rel (%p1475) target = $region72
        $region71: #{pipool_forward.1} parent=59 // pred_region
          %v1478 = vld [vmem:[#allocation4] sm:$0xff]
          %v1479 = vld [vmem:[#allocation4 + $0x8] sm:$0x3f]
          %s1480 = sld [smem:[#allocation5 + $0x1]]
          %v1481 = vstv %s1480
          %v1482 = vadd.f32 %v1478, %v1481
          %v1483 = vadd.f32 %v1479, %v1481
          %1484 = vst.msk [vmem:[%s541] sm:$0xff] %vm1470, %v1482
          %1485 = vst.msk [vmem:[%s541 + $0x8] sm:$0x3f] %vm1472, %v1483
        $region72: #{pipool_forward.1} parent=59 // pred_fallthru
          _
        %p1486 = scmp.lt.s32.totalorder %s26, 1
        %s1487 = scalar_select %p1486, %s26, 1
        %s1488 = smul.addr %s1487, 2
        %s1489 = smul.addr %s1488, 8
        %s1490 = scalar_lea.vmem %s10, %s1489
        // Predicated region
        $region73: #{pipool_forward.1} parent=59 // pred_check
          %p1491 = pneg %p300
        $region74: #{pipool_forward.1} parent=59 // pred_check_branch
          %1493 = sbr.rel (%p1491) target = $region76
        $region75: #{pipool_forward.1} parent=59 // pred_region
          _
        $region76: #{pipool_forward.1} parent=59 // pred_fallthru
          _
      $region60: #{pipool_forward.1} parent=5 // pred_fallthru
        _
      %p1494 = scmp.le.s32.totalorder 2, %s17
      // Predicated region
      $region77: #{pipool_forward.1} parent=5 // pred_check
        %p1495 = pneg %p1494
      $region78: #{pipool_forward.1} parent=5 // pred_check_branch
        %1497 = sbr.rel (%p1495) target = $region80
      $region79: #{pipool_forward.1} parent=5 // pred_region
        %s1498 = ssub.s32 %s17, 2
        // Predicated region
        $region81: #{pipool_forward.1} parent=79 // pred_check
          %p1499 = pneg %p306
        $region82: #{pipool_forward.1} parent=79 // pred_check_branch
          %1501 = sbr.rel (%p1499) target = $region84
        $region83: #{pipool_forward.1} parent=79 // pred_region
          %p1502 = scmp.lt.s32.totalorder %s28, 1
          %s1503 = scalar_select %p1502, %s28, 1
          %s1504 = smul.addr %s1503, 2
          %s1505 = smul.addr %s1504, 8
          %s1506 = scalar_lea.vmem %s10, %s1505
        $region84: #{pipool_forward.1} parent=79 // pred_fallthru
          _
      $region80: #{pipool_forward.1} parent=5 // pred_fallthru
        _
    $region6: #{pipool_forward.1} parent=1 // loop_footer
      %s21 = sadd.s32 1, %s17
    $region7: #{pipool_forward.1} parent=1 // loop_footer_branch
      %16 = sbr.rel target = $region3
    $region8: #{pipool_forward.1} parent=1 // loop_exit
      _
    %1507 = vsyncpa [#allocation6], 1
    %s1508 = scalar_lea.sflag [#allocation6], 1
    %1509 = vsyncpa %s1508, 1

</llo_original>
